<compile_context>
chip_gen: v6e
topology: v6e:2x2x1
jax: 0.10.0
libtpu: 0.0.40
codegen_flags: <defaults>
</compile_context>

<pallas_src>
import math

import jax
import jax.numpy as jnp
from jax.experimental import pallas as pl
from jax.experimental.pallas import tpu as pltpu

# ----------------------------- config (small synthetic sizes) ---------------
VOCAB = 100          # vocab size
TYPE_VOCAB = 2       # token-type vocab
MAX_POS = 16         # max position embeddings
B = 2                # batch
S = 8                # sequence length
H = 32               # hidden size
NH = 4               # attention heads
HD = H // NH         # head dim
FFN = 64             # feed-forward intermediate size
NLAYERS = 2          # encoder layers
EPS = 1e-12          # LayerNorm eps (BERT/RoBERTa default)
BS = B * S           # merged batch*seq rows fed to every matmul

# packed per-layer vector layout (one row of `vecs` per layer, f32)
O_BQKV = 0                 # [0 , 3H)   fused q/k/v bias (q part pre-scaled)
O_BO = O_BQKV + 3 * H      # [3H, 4H)   attention output bias
O_B1 = O_BO + H            # ffn bias 1
O_B2 = O_B1 + FFN          # ffn bias 2
O_LN1G = O_B2 + H
O_LN1B = O_LN1G + H
O_LN2G = O_LN1B + H
O_LN2B = O_LN2G + H
VEC_W = O_LN2B + H         # = 352
# row index NLAYERS of `vecs` holds the embedding-LN gamma [0:H] / beta [H:2H]


# ----------------------------- in-kernel helpers -----------------------------
def _layer_norm(x, gamma, beta):
    # x: [BS, H] f32, gamma/beta: [1, H] f32
    mu = jnp.mean(x, axis=-1, keepdims=True)
    var = jnp.mean((x - mu) ** 2, axis=-1, keepdims=True)
    return (x - mu) * jax.lax.rsqrt(var + EPS) * gamma + beta


def _gelu(x):
    # TODO(synk): PyTorch BERT uses exact erf-GELU; tanh approximation used here
    # for guaranteed TPU lowering (difference < 1e-3).
    return 0.5 * x * (1.0 + jnp.tanh(0.7978845608028654 * (x + 0.044715 * x * x * x)))


def _bf16(x):
    return x.astype(jnp.bfloat16)


# ----------------------------- fused forward kernel --------------------------
def fused_encoder_kernel(x_ref, mask_ref, wqkv_ref, wo_ref, w1_ref, w2_ref,
                         vecs_ref, out_ref):
    add_mask = mask_ref[...]                                   # [BS, BS] additive

    # ---- embeddings: (word+pos+type pre-summed in wrapper), then LayerNorm ----
    x = x_ref[...].astype(jnp.float32)                         # [BS, H]
    x = _layer_norm(x,
                    vecs_ref[NLAYERS:NLAYERS + 1, 0:H],
                    vecs_ref[NLAYERS:NLAYERS + 1, H:2 * H])

    # ---- transformer layers (static unrolled; NLAYERS is tiny) ----
    for l in range(NLAYERS):
        bqkv = vecs_ref[l:l + 1, O_BQKV:O_BQKV + 3 * H]        # [1, 3H]
        bo = vecs_ref[l:l + 1, O_BO:O_BO + H]                  # [1, H]
        b1 = vecs_ref[l:l + 1, O_B1:O_B1 + FFN]                # [1, FFN]
        b2 = vecs_ref[l:l + 1, O_B2:O_B2 + H]                  # [1, H]
        ln1g = vecs_ref[l:l + 1, O_LN1G:O_LN1G + H]
        ln1b = vecs_ref[l:l + 1, O_LN1B:O_LN1B + H]
        ln2g = vecs_ref[l:l + 1, O_LN2G:O_LN2G + H]
        ln2b = vecs_ref[l:l + 1, O_LN2B:O_LN2B + H]

        # fused QKV projection over all B*S rows (1/sqrt(HD) folded into Wq/bq)
        qkv = jnp.dot(_bf16(x), wqkv_ref[l],
                      preferred_element_type=jnp.float32) + bqkv         # [BS, 3H]
        q = qkv[:, 0 * H:1 * H]
        k = qkv[:, 1 * H:2 * H]
        v = qkv[:, 2 * H:3 * H]

        ctx_heads = []
        for h in range(NH):                                    # static per-head loop
            lo = h * HD
            qh = _bf16(q[:, lo:lo + HD])                       # [BS, HD]
            kh = _bf16(k[:, lo:lo + HD])
            vh = _bf16(v[:, lo:lo + HD])
            # q @ k^T via contracting-dim dot_general: no explicit XLU transpose.
            s = jax.lax.dot_general(qh, kh, (((1,), (1,)), ((), ())),
                                    preferred_element_type=jnp.float32)  # [BS, BS]
            # block-diagonal mask kills cross-batch entries + masked key tokens
            s = s + add_mask
            s = s - jnp.max(s, axis=-1, keepdims=True)
            p = jnp.exp(s)
            p = p * pl.reciprocal(jnp.sum(p, axis=-1, keepdims=True), approx=True)
            ctx_heads.append(jnp.dot(_bf16(p), vh,
                                     preferred_element_type=jnp.float32))  # [BS, HD]

        # lane-concat heads, then ONE output-projection push per layer
        ctx = jnp.concatenate(ctx_heads, axis=1)                           # [BS, H]
        attn = jnp.dot(_bf16(ctx), wo_ref[l],
                       preferred_element_type=jnp.float32) + bo

        h1 = _layer_norm(x + attn, ln1g, ln1b)                             # post-LN

        ff = jnp.dot(_bf16(h1), w1_ref[l],
                     preferred_element_type=jnp.float32) + b1              # [BS, FFN]
        ff = _gelu(ff)
        ff = jnp.dot(_bf16(ff), w2_ref[l],
                     preferred_element_type=jnp.float32) + b2              # [BS, H]
        x = _layer_norm(h1 + ff, ln2g, ln2b)

    out_ref[...] = x.astype(out_ref.dtype)                                 # [BS, H]


def _full_spec(shape):
    n = len(shape)
    return pl.BlockSpec(shape, lambda i, _n=n: (0,) * _n)


def mdetr_text_encoder_fwd(packed, x_emb, add_mask):
    # x_emb: [B*S, H] f32 (pre-summed embeddings), add_mask: [B*S, B*S] f32.
    consts = [packed["wqkv"], packed["wo"], packed["w1"], packed["w2"],
              packed["vecs"]]
    out = pl.pallas_call(
        fused_encoder_kernel,
        out_shape=jax.ShapeDtypeStruct((BS, H), jnp.float32),
        grid=(1,),
        in_specs=[_full_spec(x_emb.shape), _full_spec(add_mask.shape)]
                 + [_full_spec(c.shape) for c in consts],
        out_specs=_full_spec((BS, H)),
        compiler_params=pltpu.CompilerParams(dimension_semantics=("arbitrary",)),
    )(x_emb, add_mask, *consts)
    return out.reshape(B, S, H)


# ----------------------------- full module forward ---------------------------
@jax.jit
def mdetr_text_encoder(packed, input_ids, attention_mask=None,
                       token_type_ids=None, position_ids=None):
    bsz, seq = input_ids.shape
    if token_type_ids is None:
        token_type_ids = jnp.zeros_like(input_ids)
    if position_ids is None:
        # TODO(synk): RoBERTa checkpoints use create_position_ids_from_input_ids
        # (offset by padding_idx, skipping pads); callers should pass position_ids.
        position_ids = jnp.broadcast_to(jnp.arange(seq, dtype=jnp.int32), (bsz, seq))

    # Embedding-table gathers are data-dependent indexing -> plain JAX glue;
    # the three adds fuse into the gathers, so only ONE activation hits HBM.
    word = jnp.take(packed["word_emb"], input_ids, axis=0)        # [B, S, H]
    pos = jnp.take(packed["pos_emb"], position_ids, axis=0)       # [B, S, H]
    typ = jnp.take(packed["type_emb"], token_type_ids, axis=0)    # [B, S, H]
    x_emb = (word + pos + typ).reshape(bsz * seq, H).astype(jnp.float32)

    # Build the merged-batch additive attention mask [B*S, B*S]:
    #   allowed(query i, key j) iff same batch row AND key j not masked.
    if attention_mask is None:
        key_masked = jnp.zeros((bsz * seq,), dtype=bool)
    else:
        # True == masked token (MDETR convention)
        key_masked = attention_mask.reshape(bsz * seq).astype(bool)
    batch_ids = jnp.repeat(jnp.arange(bsz, dtype=jnp.int32), seq)     # [B*S]
    allowed = (batch_ids[:, None] == batch_ids[None, :]) & (~key_masked)[None, :]
    add_mask = jnp.where(allowed, 0.0, -1e9).astype(jnp.float32)      # [B*S, B*S]

    return mdetr_text_encoder_fwd(packed, x_emb, add_mask)            # [B, S, H]


# ----------------------------- parameters ------------------------------------
def init_params(key):
    """PyTorch-style per-layer params; weights stored [in_dim, out_dim]."""
    def nrm(k, shape, scale=0.02):
        return scale * jax.random.normal(k, shape, jnp.float32)

    keys = jax.random.split(key, 4 + NLAYERS)
    embeddings = {
        "word_emb": nrm(keys[0], (VOCAB, H)),
        "pos_emb": nrm(keys[1], (MAX_POS, H)),
        "type_emb": nrm(keys[2], (TYPE_VOCAB, H)),
        "ln_g": jnp.ones((1, H), jnp.float32),
        "ln_b": jnp.zeros((1, H), jnp.float32),
    }
    layers = []
    for li in range(NLAYERS):
        lk = jax.random.split(keys[4 + li], 6)
        layers.append({
            "wq": nrm(lk[0], (H, H)),   "bq": jnp.zeros((1, H), jnp.float32),
            "wk": nrm(lk[1], (H, H)),   "bk": jnp.zeros((1, H), jnp.float32),
            "wv": nrm(lk[2], (H, H)),   "bv": jnp.zeros((1, H), jnp.float32),
            "wo": nrm(lk[3], (H, H)),   "bo": jnp.zeros((1, H), jnp.float32),
            "ln1_g": jnp.ones((1, H), jnp.float32),
            "ln1_b": jnp.zeros((1, H), jnp.float32),
            "w1": nrm(lk[4], (H, FFN)), "b1": jnp.zeros((1, FFN), jnp.float32),
            "w2": nrm(lk[5], (FFN, H)), "b2": jnp.zeros((1, H), jnp.float32),
            "ln2_g": jnp.ones((1, H), jnp.float32),
            "ln2_b": jnp.zeros((1, H), jnp.float32),
        })
    return {"embeddings": embeddings, "layers": layers}


def pack_params(params):
    """Pack per-layer params into kernel layout:
       - Q/K/V fused into [NLAYERS, H, 3H] with 1/sqrt(HD) folded into Wq/bq,
       - matmul weights stacked over layers and cast to bf16 (f32 accumulation),
       - ALL small per-layer vectors (biases, LN gamma/beta) + embedding-LN
         consolidated into one f32 array `vecs` of shape [NLAYERS+1, VEC_W].
    """
    scale = 1.0 / math.sqrt(HD)
    wqkv, wo, w1, w2 = [], [], [], []
    vecs = jnp.zeros((NLAYERS + 1, VEC_W), jnp.float32)
    for li, lp in enumerate(params["layers"]):
        wqkv.append(jnp.concatenate([lp["wq"] * scale, lp["wk"], lp["wv"]], axis=1))
        wo.append(lp["wo"])
        w1.append(lp["w1"])
        w2.append(lp["w2"])
        bqkv = jnp.concatenate([lp["bq"] * scale, lp["bk"], lp["bv"]], axis=1)[0]
        row = jnp.concatenate([
            bqkv, lp["bo"][0], lp["b1"][0], lp["b2"][0],
            lp["ln1_g"][0], lp["ln1_b"][0], lp["ln2_g"][0], lp["ln2_b"][0]])
        assert row.shape == (VEC_W,)
        vecs = vecs.at[li].set(row)

    ep = params["embeddings"]
    vecs = vecs.at[NLAYERS, 0:H].set(ep["ln_g"][0])
    vecs = vecs.at[NLAYERS, H:2 * H].set(ep["ln_b"][0])

    return {
        "wqkv": jnp.stack(wqkv, axis=0).astype(jnp.bfloat16),   # [L, H, 3H]
        "wo": jnp.stack(wo, axis=0).astype(jnp.bfloat16),       # [L, H, H]
        "w1": jnp.stack(w1, axis=0).astype(jnp.bfloat16),       # [L, H, FFN]
        "w2": jnp.stack(w2, axis=0).astype(jnp.bfloat16),       # [L, FFN, H]
        "vecs": vecs,                                           # [L+1, VEC_W] f32
        "word_emb": ep["word_emb"],
        "pos_emb": ep["pos_emb"],
        "type_emb": ep["type_emb"],
    }


# ----------------------------- main -----------------------------------------
if __name__ == "__main__":
    root = jax.random.PRNGKey(0)
    k_param, k_ids = jax.random.split(root)

    params = init_params(k_param)
    packed = pack_params(params)

    input_ids = jax.random.randint(k_ids, (B, S), 0, VOCAB, dtype=jnp.int32)
    # mask convention: True == masked. Mask out the last 2 tokens of batch row 1.
    attention_mask = jnp.zeros((B, S), dtype=bool).at[1, S - 2:].set(True)
    token_type_ids = jnp.zeros((B, S), dtype=jnp.int32)
    position_ids = jnp.broadcast_to(jnp.arange(S, dtype=jnp.int32), (B, S))

    out = mdetr_text_encoder(packed, input_ids, attention_mask,
                             token_type_ids, position_ids)
    out = jax.block_until_ready(out)
    assert out.shape == (B, S, H), out.shape
    assert jnp.all(jnp.isfinite(out)), "non-finite output"
    print("KERNEL_OK")
</pallas_src>

<mosaic_0001>
module attributes {stable_mosaic.version = 11 : i64} {
  func.func @fused_encoder_kernel(%arg0: i32, %arg1: memref<16x32xf32, #tpu.memory_space<vmem>>, %arg2: memref<16x16xf32, #tpu.memory_space<vmem>>, %arg3: memref<2x32x96xbf16, #tpu.memory_space<vmem>>, %arg4: memref<2x32x32xbf16, #tpu.memory_space<vmem>>, %arg5: memref<2x32x64xbf16, #tpu.memory_space<vmem>>, %arg6: memref<2x64x32xbf16, #tpu.memory_space<vmem>>, %arg7: memref<3x352xf32, #tpu.memory_space<vmem>>, %arg8: memref<16x32xf32, #tpu.memory_space<vmem>>) attributes {dimension_semantics = [#tpu.dimension_semantics<arbitrary>], iteration_bounds = array<i64: 1>, scalar_prefetch = 0 : i64, scratch_operands = 0 : i64, tpu.core_type = #tpu.core_type<tc>, window_params = [{pipeline_mode = #tpu.pipeline_mode<synchronous>, transform_indices = @transform_0, window_bounds = array<i64: 16, 32>}, {pipeline_mode = #tpu.pipeline_mode<synchronous>, transform_indices = @transform_1, window_bounds = array<i64: 16, 16>}, {pipeline_mode = #tpu.pipeline_mode<synchronous>, transform_indices = @transform_2, window_bounds = array<i64: 2, 32, 96>}, {pipeline_mode = #tpu.pipeline_mode<synchronous>, transform_indices = @transform_3, window_bounds = array<i64: 2, 32, 32>}, {pipeline_mode = #tpu.pipeline_mode<synchronous>, transform_indices = @transform_4, window_bounds = array<i64: 2, 32, 64>}, {pipeline_mode = #tpu.pipeline_mode<synchronous>, transform_indices = @transform_5, window_bounds = array<i64: 2, 64, 32>}, {pipeline_mode = #tpu.pipeline_mode<synchronous>, transform_indices = @transform_6, window_bounds = array<i64: 3, 352>}, {pipeline_mode = #tpu.pipeline_mode<synchronous>, transform_indices = @transform_7, window_bounds = array<i64: 16, 32>}]} {
    %c0 = arith.constant 0 : index
    %c0_0 = arith.constant 0 : index
    %0 = vector.load %arg2[%c0, %c0_0] : memref<16x16xf32, #tpu.memory_space<vmem>>, vector<16x16xf32>
    %c0_1 = arith.constant 0 : index
    %c0_2 = arith.constant 0 : index
    %1 = vector.load %arg1[%c0_1, %c0_2] : memref<16x32xf32, #tpu.memory_space<vmem>>, vector<16x32xf32>
    %c2 = arith.constant 2 : index
    %c0_3 = arith.constant 0 : index
    %2 = vector.load %arg7[%c2, %c0_3] : memref<3x352xf32, #tpu.memory_space<vmem>>, vector<1x32xf32>
    %c2_4 = arith.constant 2 : index
    %c32 = arith.constant 32 : index
    %3 = vector.load %arg7[%c2_4, %c32] : memref<3x352xf32, #tpu.memory_space<vmem>>, vector<1x32xf32>
    %cst = arith.constant dense<0.000000e+00> : vector<16xf32>
    %4 = vector.multi_reduction <add>, %1, %cst [1] : vector<16x32xf32> to vector<16xf32>
    %5 = vector.shape_cast %4 : vector<16xf32> to vector<16x1xf32>
    %cst_5 = arith.constant 3.200000e+01 : f32
    %6 = vector.broadcast %cst_5 : f32 to vector<16x1xf32>
    %7 = arith.divf %5, %6 : vector<16x1xf32>
    %8 = vector.broadcast %7 : vector<16x1xf32> to vector<16x32xf32>
    %9 = arith.subf %1, %8 : vector<16x32xf32>
    %10 = arith.mulf %9, %9 : vector<16x32xf32>
    %cst_6 = arith.constant dense<0.000000e+00> : vector<16xf32>
    %11 = vector.multi_reduction <add>, %10, %cst_6 [1] : vector<16x32xf32> to vector<16xf32>
    %12 = vector.shape_cast %11 : vector<16xf32> to vector<16x1xf32>
    %cst_7 = arith.constant 3.200000e+01 : f32
    %13 = vector.broadcast %cst_7 : f32 to vector<16x1xf32>
    %14 = arith.divf %12, %13 : vector<16x1xf32>
    %15 = vector.broadcast %7 : vector<16x1xf32> to vector<16x32xf32>
    %16 = arith.subf %1, %15 : vector<16x32xf32>
    %cst_8 = arith.constant 9.99999996E-13 : f32
    %17 = vector.broadcast %cst_8 : f32 to vector<16x1xf32>
    %18 = arith.addf %14, %17 : vector<16x1xf32>
    %19 = math.rsqrt %18 : vector<16x1xf32>
    %20 = vector.broadcast %19 : vector<16x1xf32> to vector<16x32xf32>
    %21 = arith.mulf %16, %20 : vector<16x32xf32>
    %22 = vector.broadcast %2 : vector<1x32xf32> to vector<16x32xf32>
    %23 = arith.mulf %21, %22 : vector<16x32xf32>
    %24 = vector.broadcast %3 : vector<1x32xf32> to vector<16x32xf32>
    %25 = arith.addf %23, %24 : vector<16x32xf32>
    %c0_9 = arith.constant 0 : index
    %c0_10 = arith.constant 0 : index
    %26 = vector.load %arg7[%c0_9, %c0_10] : memref<3x352xf32, #tpu.memory_space<vmem>>, vector<1x96xf32>
    %c0_11 = arith.constant 0 : index
    %c96 = arith.constant 96 : index
    %27 = vector.load %arg7[%c0_11, %c96] : memref<3x352xf32, #tpu.memory_space<vmem>>, vector<1x32xf32>
    %c0_12 = arith.constant 0 : index
    %c128 = arith.constant 128 : index
    %28 = vector.load %arg7[%c0_12, %c128] : memref<3x352xf32, #tpu.memory_space<vmem>>, vector<1x64xf32>
    %c0_13 = arith.constant 0 : index
    %c192 = arith.constant 192 : index
    %29 = vector.load %arg7[%c0_13, %c192] : memref<3x352xf32, #tpu.memory_space<vmem>>, vector<1x32xf32>
    %c0_14 = arith.constant 0 : index
    %c224 = arith.constant 224 : index
    %30 = vector.load %arg7[%c0_14, %c224] : memref<3x352xf32, #tpu.memory_space<vmem>>, vector<1x32xf32>
    %c0_15 = arith.constant 0 : index
    %c256 = arith.constant 256 : index
    %31 = vector.load %arg7[%c0_15, %c256] : memref<3x352xf32, #tpu.memory_space<vmem>>, vector<1x32xf32>
    %c0_16 = arith.constant 0 : index
    %c288 = arith.constant 288 : index
    %32 = vector.load %arg7[%c0_16, %c288] : memref<3x352xf32, #tpu.memory_space<vmem>>, vector<1x32xf32>
    %c0_17 = arith.constant 0 : index
    %c320 = arith.constant 320 : index
    %33 = vector.load %arg7[%c0_17, %c320] : memref<3x352xf32, #tpu.memory_space<vmem>>, vector<1x32xf32>
    %34 = arith.truncf %25 : vector<16x32xf32> to vector<16x32xbf16>
    %c0_18 = arith.constant 0 : index
    %c0_19 = arith.constant 0 : index
    %c0_20 = arith.constant 0 : index
    %35 = vector.load %arg3[%c0_18, %c0_19, %c0_20] : memref<2x32x96xbf16, #tpu.memory_space<vmem>>, vector<1x32x96xbf16>
    %36 = vector.shape_cast %35 : vector<1x32x96xbf16> to vector<32x96xbf16>
    %cst_21 = arith.constant dense<0.000000e+00> : vector<16x96xf32>
    %37 = tpu.matmul %34, %36, %cst_21 {dimension_numbers = #tpu.dot_dimension_numbers<[1], [0], [0], [1], [0, 0, 1, 1], [], []>} : vector<16x32xbf16>, vector<32x96xbf16>, vector<16x96xf32> -> vector<16x96xf32>
    %38 = vector.broadcast %26 : vector<1x96xf32> to vector<16x96xf32>
    %39 = arith.addf %37, %38 : vector<16x96xf32>
    %40 = vector.extract_strided_slice %39 {offsets = [0, 0], sizes = [16, 32], strides = [1, 1]} : vector<16x96xf32> to vector<16x32xf32>
    %41 = vector.extract_strided_slice %39 {offsets = [0, 32], sizes = [16, 32], strides = [1, 1]} : vector<16x96xf32> to vector<16x32xf32>
    %42 = vector.extract_strided_slice %39 {offsets = [0, 64], sizes = [16, 32], strides = [1, 1]} : vector<16x96xf32> to vector<16x32xf32>
    %43 = vector.extract_strided_slice %40 {offsets = [0, 0], sizes = [16, 8], strides = [1, 1]} : vector<16x32xf32> to vector<16x8xf32>
    %44 = arith.truncf %43 : vector<16x8xf32> to vector<16x8xbf16>
    %45 = vector.extract_strided_slice %41 {offsets = [0, 0], sizes = [16, 8], strides = [1, 1]} : vector<16x32xf32> to vector<16x8xf32>
    %46 = arith.truncf %45 : vector<16x8xf32> to vector<16x8xbf16>
    %47 = vector.extract_strided_slice %42 {offsets = [0, 0], sizes = [16, 8], strides = [1, 1]} : vector<16x32xf32> to vector<16x8xf32>
    %48 = arith.truncf %47 : vector<16x8xf32> to vector<16x8xbf16>
    %cst_22 = arith.constant dense<0.000000e+00> : vector<16x16xf32>
    %49 = tpu.matmul %44, %46, %cst_22 {dimension_numbers = #tpu.dot_dimension_numbers<[1], [1], [0], [0], [0, 0, 1, 0], [], []>} : vector<16x8xbf16>, vector<16x8xbf16>, vector<16x16xf32> -> vector<16x16xf32>
    %50 = arith.addf %49, %0 : vector<16x16xf32>
    %cst_23 = arith.constant dense<0xFF800000> : vector<16xf32>
    %51 = vector.multi_reduction <maximumf>, %50, %cst_23 [1] : vector<16x16xf32> to vector<16xf32>
    %52 = vector.shape_cast %51 : vector<16xf32> to vector<16x1xf32>
    %53 = vector.broadcast %52 : vector<16x1xf32> to vector<16x16xf32>
    %54 = arith.subf %50, %53 : vector<16x16xf32>
    %55 = math.exp %54 : vector<16x16xf32>
    %cst_24 = arith.constant dense<0.000000e+00> : vector<16xf32>
    %56 = vector.multi_reduction <add>, %55, %cst_24 [1] : vector<16x16xf32> to vector<16xf32>
    %57 = vector.shape_cast %56 : vector<16xf32> to vector<16x1xf32>
    %58 = tpu.reciprocal %57 {approx = true} : vector<16x1xf32> -> vector<16x1xf32>
    %59 = vector.broadcast %58 : vector<16x1xf32> to vector<16x16xf32>
    %60 = arith.mulf %55, %59 : vector<16x16xf32>
    %61 = arith.truncf %60 : vector<16x16xf32> to vector<16x16xbf16>
    %cst_25 = arith.constant dense<0.000000e+00> : vector<16x8xf32>
    %62 = tpu.matmul %61, %48, %cst_25 {dimension_numbers = #tpu.dot_dimension_numbers<[1], [0], [0], [1], [0, 0, 1, 1], [], []>} : vector<16x16xbf16>, vector<16x8xbf16>, vector<16x8xf32> -> vector<16x8xf32>
    %63 = vector.extract_strided_slice %40 {offsets = [0, 8], sizes = [16, 8], strides = [1, 1]} : vector<16x32xf32> to vector<16x8xf32>
    %64 = arith.truncf %63 : vector<16x8xf32> to vector<16x8xbf16>
    %65 = vector.extract_strided_slice %41 {offsets = [0, 8], sizes = [16, 8], strides = [1, 1]} : vector<16x32xf32> to vector<16x8xf32>
    %66 = arith.truncf %65 : vector<16x8xf32> to vector<16x8xbf16>
    %67 = vector.extract_strided_slice %42 {offsets = [0, 8], sizes = [16, 8], strides = [1, 1]} : vector<16x32xf32> to vector<16x8xf32>
    %68 = arith.truncf %67 : vector<16x8xf32> to vector<16x8xbf16>
    %cst_26 = arith.constant dense<0.000000e+00> : vector<16x16xf32>
    %69 = tpu.matmul %64, %66, %cst_26 {dimension_numbers = #tpu.dot_dimension_numbers<[1], [1], [0], [0], [0, 0, 1, 0], [], []>} : vector<16x8xbf16>, vector<16x8xbf16>, vector<16x16xf32> -> vector<16x16xf32>
    %70 = arith.addf %69, %0 : vector<16x16xf32>
    %cst_27 = arith.constant dense<0xFF800000> : vector<16xf32>
    %71 = vector.multi_reduction <maximumf>, %70, %cst_27 [1] : vector<16x16xf32> to vector<16xf32>
    %72 = vector.shape_cast %71 : vector<16xf32> to vector<16x1xf32>
    %73 = vector.broadcast %72 : vector<16x1xf32> to vector<16x16xf32>
    %74 = arith.subf %70, %73 : vector<16x16xf32>
    %75 = math.exp %74 : vector<16x16xf32>
    %cst_28 = arith.constant dense<0.000000e+00> : vector<16xf32>
    %76 = vector.multi_reduction <add>, %75, %cst_28 [1] : vector<16x16xf32> to vector<16xf32>
    %77 = vector.shape_cast %76 : vector<16xf32> to vector<16x1xf32>
    %78 = tpu.reciprocal %77 {approx = true} : vector<16x1xf32> -> vector<16x1xf32>
    %79 = vector.broadcast %78 : vector<16x1xf32> to vector<16x16xf32>
    %80 = arith.mulf %75, %79 : vector<16x16xf32>
    %81 = arith.truncf %80 : vector<16x16xf32> to vector<16x16xbf16>
    %cst_29 = arith.constant dense<0.000000e+00> : vector<16x8xf32>
    %82 = tpu.matmul %81, %68, %cst_29 {dimension_numbers = #tpu.dot_dimension_numbers<[1], [0], [0], [1], [0, 0, 1, 1], [], []>} : vector<16x16xbf16>, vector<16x8xbf16>, vector<16x8xf32> -> vector<16x8xf32>
    %83 = vector.extract_strided_slice %40 {offsets = [0, 16], sizes = [16, 8], strides = [1, 1]} : vector<16x32xf32> to vector<16x8xf32>
    %84 = arith.truncf %83 : vector<16x8xf32> to vector<16x8xbf16>
    %85 = vector.extract_strided_slice %41 {offsets = [0, 16], sizes = [16, 8], strides = [1, 1]} : vector<16x32xf32> to vector<16x8xf32>
    %86 = arith.truncf %85 : vector<16x8xf32> to vector<16x8xbf16>
    %87 = vector.extract_strided_slice %42 {offsets = [0, 16], sizes = [16, 8], strides = [1, 1]} : vector<16x32xf32> to vector<16x8xf32>
    %88 = arith.truncf %87 : vector<16x8xf32> to vector<16x8xbf16>
    %cst_30 = arith.constant dense<0.000000e+00> : vector<16x16xf32>
    %89 = tpu.matmul %84, %86, %cst_30 {dimension_numbers = #tpu.dot_dimension_numbers<[1], [1], [0], [0], [0, 0, 1, 0], [], []>} : vector<16x8xbf16>, vector<16x8xbf16>, vector<16x16xf32> -> vector<16x16xf32>
    %90 = arith.addf %89, %0 : vector<16x16xf32>
    %cst_31 = arith.constant dense<0xFF800000> : vector<16xf32>
    %91 = vector.multi_reduction <maximumf>, %90, %cst_31 [1] : vector<16x16xf32> to vector<16xf32>
    %92 = vector.shape_cast %91 : vector<16xf32> to vector<16x1xf32>
    %93 = vector.broadcast %92 : vector<16x1xf32> to vector<16x16xf32>
    %94 = arith.subf %90, %93 : vector<16x16xf32>
    %95 = math.exp %94 : vector<16x16xf32>
    %cst_32 = arith.constant dense<0.000000e+00> : vector<16xf32>
    %96 = vector.multi_reduction <add>, %95, %cst_32 [1] : vector<16x16xf32> to vector<16xf32>
    %97 = vector.shape_cast %96 : vector<16xf32> to vector<16x1xf32>
    %98 = tpu.reciprocal %97 {approx = true} : vector<16x1xf32> -> vector<16x1xf32>
    %99 = vector.broadcast %98 : vector<16x1xf32> to vector<16x16xf32>
    %100 = arith.mulf %95, %99 : vector<16x16xf32>
    %101 = arith.truncf %100 : vector<16x16xf32> to vector<16x16xbf16>
    %cst_33 = arith.constant dense<0.000000e+00> : vector<16x8xf32>
    %102 = tpu.matmul %101, %88, %cst_33 {dimension_numbers = #tpu.dot_dimension_numbers<[1], [0], [0], [1], [0, 0, 1, 1], [], []>} : vector<16x16xbf16>, vector<16x8xbf16>, vector<16x8xf32> -> vector<16x8xf32>
    %103 = vector.extract_strided_slice %40 {offsets = [0, 24], sizes = [16, 8], strides = [1, 1]} : vector<16x32xf32> to vector<16x8xf32>
    %104 = arith.truncf %103 : vector<16x8xf32> to vector<16x8xbf16>
    %105 = vector.extract_strided_slice %41 {offsets = [0, 24], sizes = [16, 8], strides = [1, 1]} : vector<16x32xf32> to vector<16x8xf32>
    %106 = arith.truncf %105 : vector<16x8xf32> to vector<16x8xbf16>
    %107 = vector.extract_strided_slice %42 {offsets = [0, 24], sizes = [16, 8], strides = [1, 1]} : vector<16x32xf32> to vector<16x8xf32>
    %108 = arith.truncf %107 : vector<16x8xf32> to vector<16x8xbf16>
    %cst_34 = arith.constant dense<0.000000e+00> : vector<16x16xf32>
    %109 = tpu.matmul %104, %106, %cst_34 {dimension_numbers = #tpu.dot_dimension_numbers<[1], [1], [0], [0], [0, 0, 1, 0], [], []>} : vector<16x8xbf16>, vector<16x8xbf16>, vector<16x16xf32> -> vector<16x16xf32>
    %110 = arith.addf %109, %0 : vector<16x16xf32>
    %cst_35 = arith.constant dense<0xFF800000> : vector<16xf32>
    %111 = vector.multi_reduction <maximumf>, %110, %cst_35 [1] : vector<16x16xf32> to vector<16xf32>
    %112 = vector.shape_cast %111 : vector<16xf32> to vector<16x1xf32>
    %113 = vector.broadcast %112 : vector<16x1xf32> to vector<16x16xf32>
    %114 = arith.subf %110, %113 : vector<16x16xf32>
    %115 = math.exp %114 : vector<16x16xf32>
    %cst_36 = arith.constant dense<0.000000e+00> : vector<16xf32>
    %116 = vector.multi_reduction <add>, %115, %cst_36 [1] : vector<16x16xf32> to vector<16xf32>
    %117 = vector.shape_cast %116 : vector<16xf32> to vector<16x1xf32>
    %118 = tpu.reciprocal %117 {approx = true} : vector<16x1xf32> -> vector<16x1xf32>
    %119 = vector.broadcast %118 : vector<16x1xf32> to vector<16x16xf32>
    %120 = arith.mulf %115, %119 : vector<16x16xf32>
    %121 = arith.truncf %120 : vector<16x16xf32> to vector<16x16xbf16>
    %cst_37 = arith.constant dense<0.000000e+00> : vector<16x8xf32>
    %122 = tpu.matmul %121, %108, %cst_37 {dimension_numbers = #tpu.dot_dimension_numbers<[1], [0], [0], [1], [0, 0, 1, 1], [], []>} : vector<16x16xbf16>, vector<16x8xbf16>, vector<16x8xf32> -> vector<16x8xf32>
    %123 = tpu.concatenate %62, %82, %102, %122 in 1 : vector<16x8xf32>, vector<16x8xf32>, vector<16x8xf32>, vector<16x8xf32> -> vector<16x32xf32>
    %124 = arith.truncf %123 : vector<16x32xf32> to vector<16x32xbf16>
    %c0_38 = arith.constant 0 : index
    %c0_39 = arith.constant 0 : index
    %c0_40 = arith.constant 0 : index
    %125 = vector.load %arg4[%c0_38, %c0_39, %c0_40] : memref<2x32x32xbf16, #tpu.memory_space<vmem>>, vector<1x32x32xbf16>
    %126 = vector.shape_cast %125 : vector<1x32x32xbf16> to vector<32x32xbf16>
    %cst_41 = arith.constant dense<0.000000e+00> : vector<16x32xf32>
    %127 = tpu.matmul %124, %126, %cst_41 {dimension_numbers = #tpu.dot_dimension_numbers<[1], [0], [0], [1], [0, 0, 1, 1], [], []>} : vector<16x32xbf16>, vector<32x32xbf16>, vector<16x32xf32> -> vector<16x32xf32>
    %128 = vector.broadcast %27 : vector<1x32xf32> to vector<16x32xf32>
    %129 = arith.addf %127, %128 : vector<16x32xf32>
    %130 = arith.addf %25, %129 : vector<16x32xf32>
    %cst_42 = arith.constant dense<0.000000e+00> : vector<16xf32>
    %131 = vector.multi_reduction <add>, %130, %cst_42 [1] : vector<16x32xf32> to vector<16xf32>
    %132 = vector.shape_cast %131 : vector<16xf32> to vector<16x1xf32>
    %cst_43 = arith.constant 3.200000e+01 : f32
    %133 = vector.broadcast %cst_43 : f32 to vector<16x1xf32>
    %134 = arith.divf %132, %133 : vector<16x1xf32>
    %135 = vector.broadcast %134 : vector<16x1xf32> to vector<16x32xf32>
    %136 = arith.subf %130, %135 : vector<16x32xf32>
    %137 = arith.mulf %136, %136 : vector<16x32xf32>
    %cst_44 = arith.constant dense<0.000000e+00> : vector<16xf32>
    %138 = vector.multi_reduction <add>, %137, %cst_44 [1] : vector<16x32xf32> to vector<16xf32>
    %139 = vector.shape_cast %138 : vector<16xf32> to vector<16x1xf32>
    %cst_45 = arith.constant 3.200000e+01 : f32
    %140 = vector.broadcast %cst_45 : f32 to vector<16x1xf32>
    %141 = arith.divf %139, %140 : vector<16x1xf32>
    %142 = vector.broadcast %134 : vector<16x1xf32> to vector<16x32xf32>
    %143 = arith.subf %130, %142 : vector<16x32xf32>
    %cst_46 = arith.constant 9.99999996E-13 : f32
    %144 = vector.broadcast %cst_46 : f32 to vector<16x1xf32>
    %145 = arith.addf %141, %144 : vector<16x1xf32>
    %146 = math.rsqrt %145 : vector<16x1xf32>
    %147 = vector.broadcast %146 : vector<16x1xf32> to vector<16x32xf32>
    %148 = arith.mulf %143, %147 : vector<16x32xf32>
    %149 = vector.broadcast %30 : vector<1x32xf32> to vector<16x32xf32>
    %150 = arith.mulf %148, %149 : vector<16x32xf32>
    %151 = vector.broadcast %31 : vector<1x32xf32> to vector<16x32xf32>
    %152 = arith.addf %150, %151 : vector<16x32xf32>
    %153 = arith.truncf %152 : vector<16x32xf32> to vector<16x32xbf16>
    %c0_47 = arith.constant 0 : index
    %c0_48 = arith.constant 0 : index
    %c0_49 = arith.constant 0 : index
    %154 = vector.load %arg5[%c0_47, %c0_48, %c0_49] : memref<2x32x64xbf16, #tpu.memory_space<vmem>>, vector<1x32x64xbf16>
    %155 = vector.shape_cast %154 : vector<1x32x64xbf16> to vector<32x64xbf16>
    %cst_50 = arith.constant dense<0.000000e+00> : vector<16x64xf32>
    %156 = tpu.matmul %153, %155, %cst_50 {dimension_numbers = #tpu.dot_dimension_numbers<[1], [0], [0], [1], [0, 0, 1, 1], [], []>} : vector<16x32xbf16>, vector<32x64xbf16>, vector<16x64xf32> -> vector<16x64xf32>
    %157 = vector.broadcast %28 : vector<1x64xf32> to vector<16x64xf32>
    %158 = arith.addf %156, %157 : vector<16x64xf32>
    %cst_51 = arith.constant 5.000000e-01 : f32
    %159 = vector.broadcast %cst_51 : f32 to vector<16x64xf32>
    %160 = arith.mulf %159, %158 : vector<16x64xf32>
    %cst_52 = arith.constant 4.471500e-02 : f32
    %161 = vector.broadcast %cst_52 : f32 to vector<16x64xf32>
    %162 = arith.mulf %161, %158 : vector<16x64xf32>
    %163 = arith.mulf %162, %158 : vector<16x64xf32>
    %164 = arith.mulf %163, %158 : vector<16x64xf32>
    %165 = arith.addf %158, %164 : vector<16x64xf32>
    %cst_53 = arith.constant 0.797884583 : f32
    %166 = vector.broadcast %cst_53 : f32 to vector<16x64xf32>
    %167 = arith.mulf %166, %165 : vector<16x64xf32>
    %168 = math.tanh %167 : vector<16x64xf32>
    %cst_54 = arith.constant 1.000000e+00 : f32
    %169 = vector.broadcast %cst_54 : f32 to vector<16x64xf32>
    %170 = arith.addf %169, %168 : vector<16x64xf32>
    %171 = arith.mulf %160, %170 : vector<16x64xf32>
    %172 = arith.truncf %171 : vector<16x64xf32> to vector<16x64xbf16>
    %c0_55 = arith.constant 0 : index
    %c0_56 = arith.constant 0 : index
    %c0_57 = arith.constant 0 : index
    %173 = vector.load %arg6[%c0_55, %c0_56, %c0_57] : memref<2x64x32xbf16, #tpu.memory_space<vmem>>, vector<1x64x32xbf16>
    %174 = vector.shape_cast %173 : vector<1x64x32xbf16> to vector<64x32xbf16>
    %cst_58 = arith.constant dense<0.000000e+00> : vector<16x32xf32>
    %175 = tpu.matmul %172, %174, %cst_58 {dimension_numbers = #tpu.dot_dimension_numbers<[1], [0], [0], [1], [0, 0, 1, 1], [], []>} : vector<16x64xbf16>, vector<64x32xbf16>, vector<16x32xf32> -> vector<16x32xf32>
    %176 = vector.broadcast %29 : vector<1x32xf32> to vector<16x32xf32>
    %177 = arith.addf %175, %176 : vector<16x32xf32>
    %178 = arith.addf %152, %177 : vector<16x32xf32>
    %cst_59 = arith.constant dense<0.000000e+00> : vector<16xf32>
    %179 = vector.multi_reduction <add>, %178, %cst_59 [1] : vector<16x32xf32> to vector<16xf32>
    %180 = vector.shape_cast %179 : vector<16xf32> to vector<16x1xf32>
    %cst_60 = arith.constant 3.200000e+01 : f32
    %181 = vector.broadcast %cst_60 : f32 to vector<16x1xf32>
    %182 = arith.divf %180, %181 : vector<16x1xf32>
    %183 = vector.broadcast %182 : vector<16x1xf32> to vector<16x32xf32>
    %184 = arith.subf %178, %183 : vector<16x32xf32>
    %185 = arith.mulf %184, %184 : vector<16x32xf32>
    %cst_61 = arith.constant dense<0.000000e+00> : vector<16xf32>
    %186 = vector.multi_reduction <add>, %185, %cst_61 [1] : vector<16x32xf32> to vector<16xf32>
    %187 = vector.shape_cast %186 : vector<16xf32> to vector<16x1xf32>
    %cst_62 = arith.constant 3.200000e+01 : f32
    %188 = vector.broadcast %cst_62 : f32 to vector<16x1xf32>
    %189 = arith.divf %187, %188 : vector<16x1xf32>
    %190 = vector.broadcast %182 : vector<16x1xf32> to vector<16x32xf32>
    %191 = arith.subf %178, %190 : vector<16x32xf32>
    %cst_63 = arith.constant 9.99999996E-13 : f32
    %192 = vector.broadcast %cst_63 : f32 to vector<16x1xf32>
    %193 = arith.addf %189, %192 : vector<16x1xf32>
    %194 = math.rsqrt %193 : vector<16x1xf32>
    %195 = vector.broadcast %194 : vector<16x1xf32> to vector<16x32xf32>
    %196 = arith.mulf %191, %195 : vector<16x32xf32>
    %197 = vector.broadcast %32 : vector<1x32xf32> to vector<16x32xf32>
    %198 = arith.mulf %196, %197 : vector<16x32xf32>
    %199 = vector.broadcast %33 : vector<1x32xf32> to vector<16x32xf32>
    %200 = arith.addf %198, %199 : vector<16x32xf32>
    %c1 = arith.constant 1 : index
    %c0_64 = arith.constant 0 : index
    %201 = vector.load %arg7[%c1, %c0_64] : memref<3x352xf32, #tpu.memory_space<vmem>>, vector<1x96xf32>
    %c1_65 = arith.constant 1 : index
    %c96_66 = arith.constant 96 : index
    %202 = vector.load %arg7[%c1_65, %c96_66] : memref<3x352xf32, #tpu.memory_space<vmem>>, vector<1x32xf32>
    %c1_67 = arith.constant 1 : index
    %c128_68 = arith.constant 128 : index
    %203 = vector.load %arg7[%c1_67, %c128_68] : memref<3x352xf32, #tpu.memory_space<vmem>>, vector<1x64xf32>
    %c1_69 = arith.constant 1 : index
    %c192_70 = arith.constant 192 : index
    %204 = vector.load %arg7[%c1_69, %c192_70] : memref<3x352xf32, #tpu.memory_space<vmem>>, vector<1x32xf32>
    %c1_71 = arith.constant 1 : index
    %c224_72 = arith.constant 224 : index
    %205 = vector.load %arg7[%c1_71, %c224_72] : memref<3x352xf32, #tpu.memory_space<vmem>>, vector<1x32xf32>
    %c1_73 = arith.constant 1 : index
    %c256_74 = arith.constant 256 : index
    %206 = vector.load %arg7[%c1_73, %c256_74] : memref<3x352xf32, #tpu.memory_space<vmem>>, vector<1x32xf32>
    %c1_75 = arith.constant 1 : index
    %c288_76 = arith.constant 288 : index
    %207 = vector.load %arg7[%c1_75, %c288_76] : memref<3x352xf32, #tpu.memory_space<vmem>>, vector<1x32xf32>
    %c1_77 = arith.constant 1 : index
    %c320_78 = arith.constant 320 : index
    %208 = vector.load %arg7[%c1_77, %c320_78] : memref<3x352xf32, #tpu.memory_space<vmem>>, vector<1x32xf32>
    %209 = arith.truncf %200 : vector<16x32xf32> to vector<16x32xbf16>
    %c1_79 = arith.constant 1 : index
    %c0_80 = arith.constant 0 : index
    %c0_81 = arith.constant 0 : index
    %210 = vector.load %arg3[%c1_79, %c0_80, %c0_81] : memref<2x32x96xbf16, #tpu.memory_space<vmem>>, vector<1x32x96xbf16>
    %211 = vector.shape_cast %210 : vector<1x32x96xbf16> to vector<32x96xbf16>
    %cst_82 = arith.constant dense<0.000000e+00> : vector<16x96xf32>
    %212 = tpu.matmul %209, %211, %cst_82 {dimension_numbers = #tpu.dot_dimension_numbers<[1], [0], [0], [1], [0, 0, 1, 1], [], []>} : vector<16x32xbf16>, vector<32x96xbf16>, vector<16x96xf32> -> vector<16x96xf32>
    %213 = vector.broadcast %201 : vector<1x96xf32> to vector<16x96xf32>
    %214 = arith.addf %212, %213 : vector<16x96xf32>
    %215 = vector.extract_strided_slice %214 {offsets = [0, 0], sizes = [16, 32], strides = [1, 1]} : vector<16x96xf32> to vector<16x32xf32>
    %216 = vector.extract_strided_slice %214 {offsets = [0, 32], sizes = [16, 32], strides = [1, 1]} : vector<16x96xf32> to vector<16x32xf32>
    %217 = vector.extract_strided_slice %214 {offsets = [0, 64], sizes = [16, 32], strides = [1, 1]} : vector<16x96xf32> to vector<16x32xf32>
    %218 = vector.extract_strided_slice %215 {offsets = [0, 0], sizes = [16, 8], strides = [1, 1]} : vector<16x32xf32> to vector<16x8xf32>
    %219 = arith.truncf %218 : vector<16x8xf32> to vector<16x8xbf16>
    %220 = vector.extract_strided_slice %216 {offsets = [0, 0], sizes = [16, 8], strides = [1, 1]} : vector<16x32xf32> to vector<16x8xf32>
    %221 = arith.truncf %220 : vector<16x8xf32> to vector<16x8xbf16>
    %222 = vector.extract_strided_slice %217 {offsets = [0, 0], sizes = [16, 8], strides = [1, 1]} : vector<16x32xf32> to vector<16x8xf32>
    %223 = arith.truncf %222 : vector<16x8xf32> to vector<16x8xbf16>
    %cst_83 = arith.constant dense<0.000000e+00> : vector<16x16xf32>
    %224 = tpu.matmul %219, %221, %cst_83 {dimension_numbers = #tpu.dot_dimension_numbers<[1], [1], [0], [0], [0, 0, 1, 0], [], []>} : vector<16x8xbf16>, vector<16x8xbf16>, vector<16x16xf32> -> vector<16x16xf32>
    %225 = arith.addf %224, %0 : vector<16x16xf32>
    %cst_84 = arith.constant dense<0xFF800000> : vector<16xf32>
    %226 = vector.multi_reduction <maximumf>, %225, %cst_84 [1] : vector<16x16xf32> to vector<16xf32>
    %227 = vector.shape_cast %226 : vector<16xf32> to vector<16x1xf32>
    %228 = vector.broadcast %227 : vector<16x1xf32> to vector<16x16xf32>
    %229 = arith.subf %225, %228 : vector<16x16xf32>
    %230 = math.exp %229 : vector<16x16xf32>
    %cst_85 = arith.constant dense<0.000000e+00> : vector<16xf32>
    %231 = vector.multi_reduction <add>, %230, %cst_85 [1] : vector<16x16xf32> to vector<16xf32>
    %232 = vector.shape_cast %231 : vector<16xf32> to vector<16x1xf32>
    %233 = tpu.reciprocal %232 {approx = true} : vector<16x1xf32> -> vector<16x1xf32>
    %234 = vector.broadcast %233 : vector<16x1xf32> to vector<16x16xf32>
    %235 = arith.mulf %230, %234 : vector<16x16xf32>
    %236 = arith.truncf %235 : vector<16x16xf32> to vector<16x16xbf16>
    %cst_86 = arith.constant dense<0.000000e+00> : vector<16x8xf32>
    %237 = tpu.matmul %236, %223, %cst_86 {dimension_numbers = #tpu.dot_dimension_numbers<[1], [0], [0], [1], [0, 0, 1, 1], [], []>} : vector<16x16xbf16>, vector<16x8xbf16>, vector<16x8xf32> -> vector<16x8xf32>
    %238 = vector.extract_strided_slice %215 {offsets = [0, 8], sizes = [16, 8], strides = [1, 1]} : vector<16x32xf32> to vector<16x8xf32>
    %239 = arith.truncf %238 : vector<16x8xf32> to vector<16x8xbf16>
    %240 = vector.extract_strided_slice %216 {offsets = [0, 8], sizes = [16, 8], strides = [1, 1]} : vector<16x32xf32> to vector<16x8xf32>
    %241 = arith.truncf %240 : vector<16x8xf32> to vector<16x8xbf16>
    %242 = vector.extract_strided_slice %217 {offsets = [0, 8], sizes = [16, 8], strides = [1, 1]} : vector<16x32xf32> to vector<16x8xf32>
    %243 = arith.truncf %242 : vector<16x8xf32> to vector<16x8xbf16>
    %cst_87 = arith.constant dense<0.000000e+00> : vector<16x16xf32>
    %244 = tpu.matmul %239, %241, %cst_87 {dimension_numbers = #tpu.dot_dimension_numbers<[1], [1], [0], [0], [0, 0, 1, 0], [], []>} : vector<16x8xbf16>, vector<16x8xbf16>, vector<16x16xf32> -> vector<16x16xf32>
    %245 = arith.addf %244, %0 : vector<16x16xf32>
    %cst_88 = arith.constant dense<0xFF800000> : vector<16xf32>
    %246 = vector.multi_reduction <maximumf>, %245, %cst_88 [1] : vector<16x16xf32> to vector<16xf32>
    %247 = vector.shape_cast %246 : vector<16xf32> to vector<16x1xf32>
    %248 = vector.broadcast %247 : vector<16x1xf32> to vector<16x16xf32>
    %249 = arith.subf %245, %248 : vector<16x16xf32>
    %250 = math.exp %249 : vector<16x16xf32>
    %cst_89 = arith.constant dense<0.000000e+00> : vector<16xf32>
    %251 = vector.multi_reduction <add>, %250, %cst_89 [1] : vector<16x16xf32> to vector<16xf32>
    %252 = vector.shape_cast %251 : vector<16xf32> to vector<16x1xf32>
    %253 = tpu.reciprocal %252 {approx = true} : vector<16x1xf32> -> vector<16x1xf32>
    %254 = vector.broadcast %253 : vector<16x1xf32> to vector<16x16xf32>
    %255 = arith.mulf %250, %254 : vector<16x16xf32>
    %256 = arith.truncf %255 : vector<16x16xf32> to vector<16x16xbf16>
    %cst_90 = arith.constant dense<0.000000e+00> : vector<16x8xf32>
    %257 = tpu.matmul %256, %243, %cst_90 {dimension_numbers = #tpu.dot_dimension_numbers<[1], [0], [0], [1], [0, 0, 1, 1], [], []>} : vector<16x16xbf16>, vector<16x8xbf16>, vector<16x8xf32> -> vector<16x8xf32>
    %258 = vector.extract_strided_slice %215 {offsets = [0, 16], sizes = [16, 8], strides = [1, 1]} : vector<16x32xf32> to vector<16x8xf32>
    %259 = arith.truncf %258 : vector<16x8xf32> to vector<16x8xbf16>
    %260 = vector.extract_strided_slice %216 {offsets = [0, 16], sizes = [16, 8], strides = [1, 1]} : vector<16x32xf32> to vector<16x8xf32>
    %261 = arith.truncf %260 : vector<16x8xf32> to vector<16x8xbf16>
    %262 = vector.extract_strided_slice %217 {offsets = [0, 16], sizes = [16, 8], strides = [1, 1]} : vector<16x32xf32> to vector<16x8xf32>
    %263 = arith.truncf %262 : vector<16x8xf32> to vector<16x8xbf16>
    %cst_91 = arith.constant dense<0.000000e+00> : vector<16x16xf32>
    %264 = tpu.matmul %259, %261, %cst_91 {dimension_numbers = #tpu.dot_dimension_numbers<[1], [1], [0], [0], [0, 0, 1, 0], [], []>} : vector<16x8xbf16>, vector<16x8xbf16>, vector<16x16xf32> -> vector<16x16xf32>
    %265 = arith.addf %264, %0 : vector<16x16xf32>
    %cst_92 = arith.constant dense<0xFF800000> : vector<16xf32>
    %266 = vector.multi_reduction <maximumf>, %265, %cst_92 [1] : vector<16x16xf32> to vector<16xf32>
    %267 = vector.shape_cast %266 : vector<16xf32> to vector<16x1xf32>
    %268 = vector.broadcast %267 : vector<16x1xf32> to vector<16x16xf32>
    %269 = arith.subf %265, %268 : vector<16x16xf32>
    %270 = math.exp %269 : vector<16x16xf32>
    %cst_93 = arith.constant dense<0.000000e+00> : vector<16xf32>
    %271 = vector.multi_reduction <add>, %270, %cst_93 [1] : vector<16x16xf32> to vector<16xf32>
    %272 = vector.shape_cast %271 : vector<16xf32> to vector<16x1xf32>
    %273 = tpu.reciprocal %272 {approx = true} : vector<16x1xf32> -> vector<16x1xf32>
    %274 = vector.broadcast %273 : vector<16x1xf32> to vector<16x16xf32>
    %275 = arith.mulf %270, %274 : vector<16x16xf32>
    %276 = arith.truncf %275 : vector<16x16xf32> to vector<16x16xbf16>
    %cst_94 = arith.constant dense<0.000000e+00> : vector<16x8xf32>
    %277 = tpu.matmul %276, %263, %cst_94 {dimension_numbers = #tpu.dot_dimension_numbers<[1], [0], [0], [1], [0, 0, 1, 1], [], []>} : vector<16x16xbf16>, vector<16x8xbf16>, vector<16x8xf32> -> vector<16x8xf32>
    %278 = vector.extract_strided_slice %215 {offsets = [0, 24], sizes = [16, 8], strides = [1, 1]} : vector<16x32xf32> to vector<16x8xf32>
    %279 = arith.truncf %278 : vector<16x8xf32> to vector<16x8xbf16>
    %280 = vector.extract_strided_slice %216 {offsets = [0, 24], sizes = [16, 8], strides = [1, 1]} : vector<16x32xf32> to vector<16x8xf32>
    %281 = arith.truncf %280 : vector<16x8xf32> to vector<16x8xbf16>
    %282 = vector.extract_strided_slice %217 {offsets = [0, 24], sizes = [16, 8], strides = [1, 1]} : vector<16x32xf32> to vector<16x8xf32>
    %283 = arith.truncf %282 : vector<16x8xf32> to vector<16x8xbf16>
    %cst_95 = arith.constant dense<0.000000e+00> : vector<16x16xf32>
    %284 = tpu.matmul %279, %281, %cst_95 {dimension_numbers = #tpu.dot_dimension_numbers<[1], [1], [0], [0], [0, 0, 1, 0], [], []>} : vector<16x8xbf16>, vector<16x8xbf16>, vector<16x16xf32> -> vector<16x16xf32>
    %285 = arith.addf %284, %0 : vector<16x16xf32>
    %cst_96 = arith.constant dense<0xFF800000> : vector<16xf32>
    %286 = vector.multi_reduction <maximumf>, %285, %cst_96 [1] : vector<16x16xf32> to vector<16xf32>
    %287 = vector.shape_cast %286 : vector<16xf32> to vector<16x1xf32>
    %288 = vector.broadcast %287 : vector<16x1xf32> to vector<16x16xf32>
    %289 = arith.subf %285, %288 : vector<16x16xf32>
    %290 = math.exp %289 : vector<16x16xf32>
    %cst_97 = arith.constant dense<0.000000e+00> : vector<16xf32>
    %291 = vector.multi_reduction <add>, %290, %cst_97 [1] : vector<16x16xf32> to vector<16xf32>
    %292 = vector.shape_cast %291 : vector<16xf32> to vector<16x1xf32>
    %293 = tpu.reciprocal %292 {approx = true} : vector<16x1xf32> -> vector<16x1xf32>
    %294 = vector.broadcast %293 : vector<16x1xf32> to vector<16x16xf32>
    %295 = arith.mulf %290, %294 : vector<16x16xf32>
    %296 = arith.truncf %295 : vector<16x16xf32> to vector<16x16xbf16>
    %cst_98 = arith.constant dense<0.000000e+00> : vector<16x8xf32>
    %297 = tpu.matmul %296, %283, %cst_98 {dimension_numbers = #tpu.dot_dimension_numbers<[1], [0], [0], [1], [0, 0, 1, 1], [], []>} : vector<16x16xbf16>, vector<16x8xbf16>, vector<16x8xf32> -> vector<16x8xf32>
    %298 = tpu.concatenate %237, %257, %277, %297 in 1 : vector<16x8xf32>, vector<16x8xf32>, vector<16x8xf32>, vector<16x8xf32> -> vector<16x32xf32>
    %299 = arith.truncf %298 : vector<16x32xf32> to vector<16x32xbf16>
    %c1_99 = arith.constant 1 : index
    %c0_100 = arith.constant 0 : index
    %c0_101 = arith.constant 0 : index
    %300 = vector.load %arg4[%c1_99, %c0_100, %c0_101] : memref<2x32x32xbf16, #tpu.memory_space<vmem>>, vector<1x32x32xbf16>
    %301 = vector.shape_cast %300 : vector<1x32x32xbf16> to vector<32x32xbf16>
    %cst_102 = arith.constant dense<0.000000e+00> : vector<16x32xf32>
    %302 = tpu.matmul %299, %301, %cst_102 {dimension_numbers = #tpu.dot_dimension_numbers<[1], [0], [0], [1], [0, 0, 1, 1], [], []>} : vector<16x32xbf16>, vector<32x32xbf16>, vector<16x32xf32> -> vector<16x32xf32>
    %303 = vector.broadcast %202 : vector<1x32xf32> to vector<16x32xf32>
    %304 = arith.addf %302, %303 : vector<16x32xf32>
    %305 = arith.addf %200, %304 : vector<16x32xf32>
    %cst_103 = arith.constant dense<0.000000e+00> : vector<16xf32>
    %306 = vector.multi_reduction <add>, %305, %cst_103 [1] : vector<16x32xf32> to vector<16xf32>
    %307 = vector.shape_cast %306 : vector<16xf32> to vector<16x1xf32>
    %cst_104 = arith.constant 3.200000e+01 : f32
    %308 = vector.broadcast %cst_104 : f32 to vector<16x1xf32>
    %309 = arith.divf %307, %308 : vector<16x1xf32>
    %310 = vector.broadcast %309 : vector<16x1xf32> to vector<16x32xf32>
    %311 = arith.subf %305, %310 : vector<16x32xf32>
    %312 = arith.mulf %311, %311 : vector<16x32xf32>
    %cst_105 = arith.constant dense<0.000000e+00> : vector<16xf32>
    %313 = vector.multi_reduction <add>, %312, %cst_105 [1] : vector<16x32xf32> to vector<16xf32>
    %314 = vector.shape_cast %313 : vector<16xf32> to vector<16x1xf32>
    %cst_106 = arith.constant 3.200000e+01 : f32
    %315 = vector.broadcast %cst_106 : f32 to vector<16x1xf32>
    %316 = arith.divf %314, %315 : vector<16x1xf32>
    %317 = vector.broadcast %309 : vector<16x1xf32> to vector<16x32xf32>
    %318 = arith.subf %305, %317 : vector<16x32xf32>
    %cst_107 = arith.constant 9.99999996E-13 : f32
    %319 = vector.broadcast %cst_107 : f32 to vector<16x1xf32>
    %320 = arith.addf %316, %319 : vector<16x1xf32>
    %321 = math.rsqrt %320 : vector<16x1xf32>
    %322 = vector.broadcast %321 : vector<16x1xf32> to vector<16x32xf32>
    %323 = arith.mulf %318, %322 : vector<16x32xf32>
    %324 = vector.broadcast %205 : vector<1x32xf32> to vector<16x32xf32>
    %325 = arith.mulf %323, %324 : vector<16x32xf32>
    %326 = vector.broadcast %206 : vector<1x32xf32> to vector<16x32xf32>
    %327 = arith.addf %325, %326 : vector<16x32xf32>
    %328 = arith.truncf %327 : vector<16x32xf32> to vector<16x32xbf16>
    %c1_108 = arith.constant 1 : index
    %c0_109 = arith.constant 0 : index
    %c0_110 = arith.constant 0 : index
    %329 = vector.load %arg5[%c1_108, %c0_109, %c0_110] : memref<2x32x64xbf16, #tpu.memory_space<vmem>>, vector<1x32x64xbf16>
    %330 = vector.shape_cast %329 : vector<1x32x64xbf16> to vector<32x64xbf16>
    %cst_111 = arith.constant dense<0.000000e+00> : vector<16x64xf32>
    %331 = tpu.matmul %328, %330, %cst_111 {dimension_numbers = #tpu.dot_dimension_numbers<[1], [0], [0], [1], [0, 0, 1, 1], [], []>} : vector<16x32xbf16>, vector<32x64xbf16>, vector<16x64xf32> -> vector<16x64xf32>
    %332 = vector.broadcast %203 : vector<1x64xf32> to vector<16x64xf32>
    %333 = arith.addf %331, %332 : vector<16x64xf32>
    %cst_112 = arith.constant 5.000000e-01 : f32
    %334 = vector.broadcast %cst_112 : f32 to vector<16x64xf32>
    %335 = arith.mulf %334, %333 : vector<16x64xf32>
    %cst_113 = arith.constant 4.471500e-02 : f32
    %336 = vector.broadcast %cst_113 : f32 to vector<16x64xf32>
    %337 = arith.mulf %336, %333 : vector<16x64xf32>
    %338 = arith.mulf %337, %333 : vector<16x64xf32>
    %339 = arith.mulf %338, %333 : vector<16x64xf32>
    %340 = arith.addf %333, %339 : vector<16x64xf32>
    %cst_114 = arith.constant 0.797884583 : f32
    %341 = vector.broadcast %cst_114 : f32 to vector<16x64xf32>
    %342 = arith.mulf %341, %340 : vector<16x64xf32>
    %343 = math.tanh %342 : vector<16x64xf32>
    %cst_115 = arith.constant 1.000000e+00 : f32
    %344 = vector.broadcast %cst_115 : f32 to vector<16x64xf32>
    %345 = arith.addf %344, %343 : vector<16x64xf32>
    %346 = arith.mulf %335, %345 : vector<16x64xf32>
    %347 = arith.truncf %346 : vector<16x64xf32> to vector<16x64xbf16>
    %c1_116 = arith.constant 1 : index
    %c0_117 = arith.constant 0 : index
    %c0_118 = arith.constant 0 : index
    %348 = vector.load %arg6[%c1_116, %c0_117, %c0_118] : memref<2x64x32xbf16, #tpu.memory_space<vmem>>, vector<1x64x32xbf16>
    %349 = vector.shape_cast %348 : vector<1x64x32xbf16> to vector<64x32xbf16>
    %cst_119 = arith.constant dense<0.000000e+00> : vector<16x32xf32>
    %350 = tpu.matmul %347, %349, %cst_119 {dimension_numbers = #tpu.dot_dimension_numbers<[1], [0], [0], [1], [0, 0, 1, 1], [], []>} : vector<16x64xbf16>, vector<64x32xbf16>, vector<16x32xf32> -> vector<16x32xf32>
    %351 = vector.broadcast %204 : vector<1x32xf32> to vector<16x32xf32>
    %352 = arith.addf %350, %351 : vector<16x32xf32>
    %353 = arith.addf %327, %352 : vector<16x32xf32>
    %cst_120 = arith.constant dense<0.000000e+00> : vector<16xf32>
    %354 = vector.multi_reduction <add>, %353, %cst_120 [1] : vector<16x32xf32> to vector<16xf32>
    %355 = vector.shape_cast %354 : vector<16xf32> to vector<16x1xf32>
    %cst_121 = arith.constant 3.200000e+01 : f32
    %356 = vector.broadcast %cst_121 : f32 to vector<16x1xf32>
    %357 = arith.divf %355, %356 : vector<16x1xf32>
    %358 = vector.broadcast %357 : vector<16x1xf32> to vector<16x32xf32>
    %359 = arith.subf %353, %358 : vector<16x32xf32>
    %360 = arith.mulf %359, %359 : vector<16x32xf32>
    %cst_122 = arith.constant dense<0.000000e+00> : vector<16xf32>
    %361 = vector.multi_reduction <add>, %360, %cst_122 [1] : vector<16x32xf32> to vector<16xf32>
    %362 = vector.shape_cast %361 : vector<16xf32> to vector<16x1xf32>
    %cst_123 = arith.constant 3.200000e+01 : f32
    %363 = vector.broadcast %cst_123 : f32 to vector<16x1xf32>
    %364 = arith.divf %362, %363 : vector<16x1xf32>
    %365 = vector.broadcast %357 : vector<16x1xf32> to vector<16x32xf32>
    %366 = arith.subf %353, %365 : vector<16x32xf32>
    %cst_124 = arith.constant 9.99999996E-13 : f32
    %367 = vector.broadcast %cst_124 : f32 to vector<16x1xf32>
    %368 = arith.addf %364, %367 : vector<16x1xf32>
    %369 = math.rsqrt %368 : vector<16x1xf32>
    %370 = vector.broadcast %369 : vector<16x1xf32> to vector<16x32xf32>
    %371 = arith.mulf %366, %370 : vector<16x32xf32>
    %372 = vector.broadcast %207 : vector<1x32xf32> to vector<16x32xf32>
    %373 = arith.mulf %371, %372 : vector<16x32xf32>
    %374 = vector.broadcast %208 : vector<1x32xf32> to vector<16x32xf32>
    %375 = arith.addf %373, %374 : vector<16x32xf32>
    %c0_125 = arith.constant 0 : index
    %c0_126 = arith.constant 0 : index
    %376 = vector.load %arg8[%c0_125, %c0_126] : memref<16x32xf32, #tpu.memory_space<vmem>>, vector<16x32xf32>
    tpu.vector_store %arg8[%c0_125, %c0_126], %375 {strides = array<i32>} : memref<16x32xf32, #tpu.memory_space<vmem>>, vector<16x32xf32>,
    return
  }
  func.func @transform_0(%arg0: i32) -> (i32, i32) {
    %c0_i32 = arith.constant 0 : i32
    %c0_i32_0 = arith.constant 0 : i32
    %c0_i32_1 = arith.constant 0 : i32
    return %c0_i32, %c0_i32_0 : i32, i32
  }
  func.func @transform_1(%arg0: i32) -> (i32, i32) {
    %c0_i32 = arith.constant 0 : i32
    %c0_i32_0 = arith.constant 0 : i32
    %c0_i32_1 = arith.constant 0 : i32
    return %c0_i32, %c0_i32_0 : i32, i32
  }
  func.func @transform_2(%arg0: i32) -> (i32, i32, i32) {
    %c0_i32 = arith.constant 0 : i32
    %c0_i32_0 = arith.constant 0 : i32
    %c0_i32_1 = arith.constant 0 : i32
    %c0_i32_2 = arith.constant 0 : i32
    return %c0_i32, %c0_i32_0, %c0_i32_1 : i32, i32, i32
  }
  func.func @transform_3(%arg0: i32) -> (i32, i32, i32) {
    %c0_i32 = arith.constant 0 : i32
    %c0_i32_0 = arith.constant 0 : i32
    %c0_i32_1 = arith.constant 0 : i32
    %c0_i32_2 = arith.constant 0 : i32
    return %c0_i32, %c0_i32_0, %c0_i32_1 : i32, i32, i32
  }
  func.func @transform_4(%arg0: i32) -> (i32, i32, i32) {
    %c0_i32 = arith.constant 0 : i32
    %c0_i32_0 = arith.constant 0 : i32
    %c0_i32_1 = arith.constant 0 : i32
    %c0_i32_2 = arith.constant 0 : i32
    return %c0_i32, %c0_i32_0, %c0_i32_1 : i32, i32, i32
  }
  func.func @transform_5(%arg0: i32) -> (i32, i32, i32) {
    %c0_i32 = arith.constant 0 : i32
    %c0_i32_0 = arith.constant 0 : i32
    %c0_i32_1 = arith.constant 0 : i32
    %c0_i32_2 = arith.constant 0 : i32
    return %c0_i32, %c0_i32_0, %c0_i32_1 : i32, i32, i32
  }
  func.func @transform_6(%arg0: i32) -> (i32, i32) {
    %c0_i32 = arith.constant 0 : i32
    %c0_i32_0 = arith.constant 0 : i32
    %c0_i32_1 = arith.constant 0 : i32
    return %c0_i32, %c0_i32_0 : i32, i32
  }
  func.func @transform_7(%arg0: i32) -> (i32, i32) {
    %c0_i32 = arith.constant 0 : i32
    %c0_i32_0 = arith.constant 0 : i32
    %c0_i32_1 = arith.constant 0 : i32
    return %c0_i32, %c0_i32_0 : i32, i32
  }
}

</mosaic_0001>

<llo_original>
// kernel: mdetr_text_encoder.1
$region0: #{mdetr_text_encoder.1}
  #allocation0 [shape = 'u32[]', space=smem, size = 0x4, offset = 0x4, fixed_abs, tag = 'smem constant byte address 0x4 - core index']
  #allocation1 [shape = 'u32[144,128]{1,0:T(1,128)}', space=vmem, size = 0x12000, scoped, tag = 'internal scratch']
  %s0 = inlined_call_operand.vmem [shape: f32[16,32], index: 0, kind: input, shape index: {}]
  %s1 = inlined_call_operand.vmem [shape: f32[16,16], index: 1, kind: input, shape index: {}]
  %s2 = inlined_call_operand.vmem [shape: bf16[2,32,96], index: 2, kind: input, shape index: {}]
  %s3 = inlined_call_operand.vmem [shape: bf16[2,32,32], index: 3, kind: input, shape index: {}]
  %s4 = inlined_call_operand.vmem [shape: bf16[2,32,64], index: 4, kind: input, shape index: {}]
  %s5 = inlined_call_operand.vmem [shape: bf16[2,64,32], index: 5, kind: input, shape index: {}]
  %s6 = inlined_call_operand.vmem [shape: f32[3,352], index: 6, kind: input, shape index: {}]
  %s7 = inlined_call_operand.hbm [shape: f32[16,32], index: 7, kind: output, shape index: {}]
  %s8 = sld [smem:[#allocation0]]
  $region38: #{mdetr_text_encoder.1} parent=0
    _
  %s10 = ssub.s32 1, %s8
  %s11 = scalar_select 0, %s10, %s8
  $region1: #{mdetr_text_encoder.1} parent=0
    #allocation2 [shape = 'u8[8192]{0}', space=vmem, size = 0x2000, scoped, tag = 'output window, operand 0, single buffered']
    #allocation3 [shape = 's32[1]{0}', space=sflag, size = 0x4, scoped, tag = 'scoped memory for mdetr_text_encoder.1']
    %12 = vsyncpa [#allocation3], 0
    // Predicated region
    $region2: #{mdetr_text_encoder.1} parent=1 // pred_check
      _
    $region3: #{mdetr_text_encoder.1} parent=1 // pred_check_branch
      %14 = sbr.rel (0) target = $region5
    $region4: #{mdetr_text_encoder.1} parent=1 // pred_region
      _
    $region5: #{mdetr_text_encoder.1} parent=1 // pred_fallthru
      _
    // Predicated region
    $region6: #{mdetr_text_encoder.1} parent=1 // pred_check
      _
    $region7: #{mdetr_text_encoder.1} parent=1 // pred_check_branch
      %16 = sbr.rel (0) target = $region9
    $region8: #{mdetr_text_encoder.1} parent=1 // pred_region
      _
    $region9: #{mdetr_text_encoder.1} parent=1 // pred_fallthru
      _
    // Predicated region
    $region10: #{mdetr_text_encoder.1} parent=1 // pred_check
      _
    $region11: #{mdetr_text_encoder.1} parent=1 // pred_check_branch
      %18 = sbr.rel (0) target = $region13
    $region12: #{mdetr_text_encoder.1} parent=1 // pred_region
      _
    $region13: #{mdetr_text_encoder.1} parent=1 // pred_fallthru
      _
    // Predicated region
    $region14: #{mdetr_text_encoder.1} parent=1 // pred_check
      _
    $region15: #{mdetr_text_encoder.1} parent=1 // pred_check_branch
      %20 = sbr.rel (0) target = $region17
    $region16: #{mdetr_text_encoder.1} parent=1 // pred_region
      _
    $region17: #{mdetr_text_encoder.1} parent=1 // pred_fallthru
      _
    // Predicated region
    $region18: #{mdetr_text_encoder.1} parent=1 // pred_check
      _
    $region19: #{mdetr_text_encoder.1} parent=1 // pred_check_branch
      %22 = sbr.rel (0) target = $region21
    $region20: #{mdetr_text_encoder.1} parent=1 // pred_region
      _
    $region21: #{mdetr_text_encoder.1} parent=1 // pred_fallthru
      _
    // Predicated region
    $region22: #{mdetr_text_encoder.1} parent=1 // pred_check
      _
    $region23: #{mdetr_text_encoder.1} parent=1 // pred_check_branch
      %24 = sbr.rel (0) target = $region25
    $region24: #{mdetr_text_encoder.1} parent=1 // pred_region
      _
    $region25: #{mdetr_text_encoder.1} parent=1 // pred_fallthru
      _
    // Predicated region
    $region26: #{mdetr_text_encoder.1} parent=1 // pred_check
      _
    $region27: #{mdetr_text_encoder.1} parent=1 // pred_check_branch
      %26 = sbr.rel (0) target = $region29
    $region28: #{mdetr_text_encoder.1} parent=1 // pred_region
      _
    $region29: #{mdetr_text_encoder.1} parent=1 // pred_fallthru
      _
    %v28 = vld [vmem:[%s1] sm:$0xff]
    %v29 = vld [vmem:[%s1 + $0x8] sm:$0xff]
    %v30 = vld [vmem:[%s0] sm:$0xff]
    %v31 = vld [vmem:[%s0 + $0x8] sm:$0xff]
    %v32 = vld [vmem:[%s6 + $0x2] sm:$0x1]
    %vm33 = vcmask 261120
    %v34 = vsel %vm33, %v30, 0.0
    %35 = vadd.xlane.f32.xlu0 %v34
    %v36 = vpop.xlane.xlu0 %35
    %v37 = vsel %vm33, %v31, 0.0
    %38 = vadd.xlane.f32.xlu0 %v37
    %v39 = vpop.xlane.xlu0 %38
    %v40 = vrcp.pop 32.0
    %v41 = vmul.f32 %v36, %v40
    %v42 = vmul.f32 %v39, %v40
    %v43 = vsub.f32 %v30, %v41
    %v44 = vsub.f32 %v31, %v42
    %v45 = vmul.f32 %v43, %v43
    %v46 = vmul.f32 %v44, %v44
    %v47 = vsel %vm33, %v45, 0.0
    %48 = vadd.xlane.f32.xlu0 %v47
    %v49 = vpop.xlane.xlu0 %48
    %v50 = vsel %vm33, %v46, 0.0
    %51 = vadd.xlane.f32.xlu0 %v50
    %v52 = vpop.xlane.xlu0 %51
    %v53 = vmul.f32 %v49, %v40
    %v54 = vmul.f32 %v52, %v40
    %v55 = vadd.f32 %v53, 1e-12
    %v56 = vadd.f32 %v54, 1e-12
    %v57 = vrsqrt.pop %v55
    %v58 = vrsqrt.pop %v56
    %v59 = vmul.f32 %v43, %v57
    %v60 = vmul.f32 %v44, %v58
    %v61 = vlaneseq
    %v62 = vshrl.u32 %v61, 7
    %v63 = vsub.s32 0, %v62
    %v64 = vrot.slane %v32, %v63
    %v65 = vmul.f32 %v59, %v64
    %v66 = vmul.f32 %v60, %v64
    %68 = vrot.lane.b32.xlu0 %v64, 96
    %v69 = vpop.permute.xlu0 %68
    %v71 = vadd.f32 %v65, %v69
    %v72 = vadd.f32 %v66, %v69
    %v73 = vld [vmem:[%s6] sm:$0x1]
    %v74 = vld [vmem:[%s6 + $0x4] sm:$0x1]
    %v75 = vld [vmem:[%s6 + $0x8] sm:$0x1]
    %v76 = vpack.c.bf16 %v72, %v71
    %v77 = vld [vmem:[%s2] sm:$0xf]
    %v78 = vld [vmem:[%s2 + $0x4] sm:$0xf]
    %v79 = vld [vmem:[%s2 + $0x8] sm:$0xf]
    %v80 = vld [vmem:[%s2 + $0xc] sm:$0xf]
    %v81 = vlaneseq
    %v82 = vshrl.u32 %v81, 7
    %v83 = vsub.s32 0, %v82
    %v84 = vrot.slane %v73, %v83
    %v89 = vunpack.c.l.b16 %v77
    %v90 = vunpack.c.l.b16 %v78
    %v91 = vunpack.c.l.b16 %v79
    %v92 = vunpack.c.l.b16 %v80
    %v93 = vpack.c.b16 %v90, %v89
    %v94 = vpack.c.b16 %v92, %v91
    %v98 = vsel %vm33, %v76, 0
    %100 = vmatprep.subr.bf16.mxu0 0
    %101 = vmatpush1.bf16.msra.mxu0 0
    %102 = vmatprep.subr.bf16.mxu0 0
    %103 = vmatpush1.bf16.msra.mxu0 0
    %104 = vmatprep.subr.bf16.mxu0 0
    %105 = vmatpush1.bf16.msra.mxu0 0
    %106 = vmatprep.subr.bf16.mxu0 0
    %107 = vmatpush1.bf16.msra.mxu0 0
    %108 = vmatprep.subr.bf16.mxu0 0
    %109 = vmatpush1.bf16.msra.mxu0 0
    %110 = vmatprep.subr.bf16.mxu0 0
    %111 = vmatpush1.bf16.msra.mxu0 0
    %112 = vmatprep.subr.bf16.mxu0 0
    %113 = vmatpush1.bf16.msra.mxu0 %v94
    %114 = vmatprep.subr.bf16.mxu0 0
    %115 = vmatpush1.bf16.msra.mxu0 %v93
    %116 = vmatprep.subr.bf16.mxu0 0
    %117 = vmatpush2.bf16.msra.mxu0 0
    %118 = vmatprep.subr.bf16.mxu0 0
    %119 = vmatpush2.bf16.msra.mxu0 0
    %120 = vmatprep.subr.bf16.mxu0 0
    %121 = vmatpush2.bf16.msra.mxu0 0
    %122 = vmatprep.subr.bf16.mxu0 0
    %123 = vmatpush2.bf16.msra.mxu0 0
    %124 = vmatprep.subr.bf16.mxu0 0
    %125 = vmatpush2.bf16.msra.mxu0 0
    %126 = vmatprep.subr.bf16.mxu0 0
    %127 = vmatpush2.bf16.msra.mxu0 0
    %128 = vmatprep.subr.bf16.mxu0 0
    %129 = vmatpush2.bf16.msra.mxu0 0
    %130 = vmatprep.subr.bf16.mxu0 0
    %131 = vmatpush2.bf16.msra.mxu0 0
    %132 = vmatprep.mubr.bf16.mxu0 0
    %133 = vmatmul.mubr.bf16.gmra.mxu0 %v98
    %v134 = vpop.f32.mrf.mxu0
    %v135 = vadd.f32 %v84, %v134
    %v136 = vpop.f32.mrf.mxu0
    %v137 = vpop.f32.mrf.mxu0
    %v138 = vadd.f32 %v84, %v137
    %v139 = vpop.f32.mrf.mxu0
    %140 = vdwg.mxu0
    %v141 = vpack.c.bf16 %v138, %v135
    %143 = vrot.lane.b32.xlu0 %v141, 96
    %v144 = vpop.permute.xlu0 %143
    %vm145 = vcmask 64512
    %v147 = vsel %vm145, %v141, 0
    %v150 = vsel %vm145, %v144, 0
    %152 = vmatprep.subr.bf16.mxu0 0
    %153 = vmatpush1.bf16.xpose.msra.mxu0 0
    %154 = vmatprep.subr.bf16.mxu0 0
    %155 = vmatpush1.bf16.xpose.msra.mxu0 0
    %156 = vmatprep.subr.bf16.mxu0 0
    %157 = vmatpush1.bf16.xpose.msra.mxu0 0
    %158 = vmatprep.subr.bf16.mxu0 0
    %159 = vmatpush1.bf16.xpose.msra.mxu0 0
    %160 = vmatprep.subr.bf16.mxu0 0
    %161 = vmatpush1.bf16.xpose.msra.mxu0 0
    %162 = vmatprep.subr.bf16.mxu0 0
    %163 = vmatpush1.bf16.xpose.msra.mxu0 0
    %164 = vmatprep.subr.bf16.mxu0 0
    %165 = vmatpush1.bf16.xpose.msra.mxu0 0
    %166 = vmatprep.subr.bf16.mxu0 0
    %167 = vmatpush1.bf16.xpose.msra.mxu0 %v150
    %168 = vmatprep.subr.bf16.mxu0 0
    %169 = vmatpush2.bf16.xpose.msra.mxu0 0
    %170 = vmatprep.subr.bf16.mxu0 0
    %171 = vmatpush2.bf16.xpose.msra.mxu0 0
    %172 = vmatprep.subr.bf16.mxu0 0
    %173 = vmatpush2.bf16.xpose.msra.mxu0 0
    %174 = vmatprep.subr.bf16.mxu0 0
    %175 = vmatpush2.bf16.xpose.msra.mxu0 0
    %176 = vmatprep.subr.bf16.mxu0 0
    %177 = vmatpush2.bf16.xpose.msra.mxu0 0
    %178 = vmatprep.subr.bf16.mxu0 0
    %179 = vmatpush2.bf16.xpose.msra.mxu0 0
    %180 = vmatprep.subr.bf16.mxu0 0
    %181 = vmatpush2.bf16.xpose.msra.mxu0 0
    %182 = vmatprep.subr.bf16.mxu0 0
    %183 = vmatpush2.bf16.xpose.msra.mxu0 0
    %184 = vmatprep.mubr.bf16.mxu0 0
    %185 = vmatmul.mubr.bf16.gmra.mxu0 %v147
    %v186 = vpop.f32.mrf.mxu0
    %v187 = vadd.f32 %v28, %v186
    %v188 = vpop.f32.mrf.mxu0
    %v189 = vpop.f32.mrf.mxu0
    %v190 = vadd.f32 %v29, %v189
    %v191 = vpop.f32.mrf.mxu0
    %192 = vdwg.mxu0
    %vm193 = vcmask 130048
    %v194 = vsel %vm193, %v187, -inf
    %195 = vmax.xlane.f32.xlu0 %v194
    %v196 = vpop.xlane.xlu0 %195
    %v197 = vsel %vm193, %v190, -inf
    %198 = vmax.xlane.f32.xlu0 %v197
    %v199 = vpop.xlane.xlu0 %198
    %v200 = vsub.f32 %v187, %v196
    %v201 = vsub.f32 %v190, %v199
    %v202 = vmul.f32 %v200, 1.442695
    %v203 = vpow.pop %v202
    %v204 = vmul.f32 %v201, 1.442695
    %v205 = vpow.pop %v204
    %v206 = vsel %vm193, %v203, 0.0
    %207 = vadd.xlane.f32.xlu0 %v206
    %v208 = vpop.xlane.xlu0 %207
    %v209 = vsel %vm193, %v205, 0.0
    %210 = vadd.xlane.f32.xlu0 %v209
    %v211 = vpop.xlane.xlu0 %210
    %v212 = vrcp.pop %v208
    %v213 = vrcp.pop %v211
    %v214 = vmul.f32 %v203, %v212
    %v215 = vmul.f32 %v205, %v213
    %v216 = vpack.c.bf16 %v215, %v214
    %217 = vrot.lane.b32.xlu0 %v141, 64
    %v218 = vpop.permute.xlu0 %217
    %v221 = vsel %vm193, %v216, 0
    %223 = vmatprep.subr.bf16.mxu0 0
    %224 = vmatpush1.bf16.msra.mxu0 0
    %225 = vmatprep.subr.bf16.mxu0 0
    %226 = vmatpush1.bf16.msra.mxu0 0
    %227 = vmatprep.subr.bf16.mxu0 0
    %228 = vmatpush1.bf16.msra.mxu0 0
    %229 = vmatprep.subr.bf16.mxu0 0
    %230 = vmatpush1.bf16.msra.mxu0 0
    %231 = vmatprep.subr.bf16.mxu0 0
    %232 = vmatpush1.bf16.msra.mxu0 0
    %233 = vmatprep.subr.bf16.mxu0 0
    %234 = vmatpush1.bf16.msra.mxu0 0
    %235 = vmatprep.subr.bf16.mxu0 0
    %236 = vmatpush1.bf16.msra.mxu0 0
    %237 = vmatprep.subr.bf16.mxu0 0
    %238 = vmatpush1.bf16.msra.mxu0 %v218
    %239 = vmatprep.subr.bf16.mxu0 0
    %240 = vmatpush2.bf16.msra.mxu0 0
    %241 = vmatprep.subr.bf16.mxu0 0
    %242 = vmatpush2.bf16.msra.mxu0 0
    %243 = vmatprep.subr.bf16.mxu0 0
    %244 = vmatpush2.bf16.msra.mxu0 0
    %245 = vmatprep.subr.bf16.mxu0 0
    %246 = vmatpush2.bf16.msra.mxu0 0
    %247 = vmatprep.subr.bf16.mxu0 0
    %248 = vmatpush2.bf16.msra.mxu0 0
    %249 = vmatprep.subr.bf16.mxu0 0
    %250 = vmatpush2.bf16.msra.mxu0 0
    %251 = vmatprep.subr.bf16.mxu0 0
    %252 = vmatpush2.bf16.msra.mxu0 0
    %253 = vmatprep.subr.bf16.mxu0 0
    %254 = vmatpush2.bf16.msra.mxu0 0
    %255 = vmatprep.mubr.bf16.mxu0 0
    %256 = vmatmul.mubr.bf16.gmra.mxu0 %v221
    %v257 = vpop.f32.mrf.mxu0
    %v258 = vadd.f32 0.0, %v257
    %v259 = vpop.f32.mrf.mxu0
    %v260 = vpop.f32.mrf.mxu0
    %v261 = vadd.f32 0.0, %v260
    %v262 = vpop.f32.mrf.mxu0
    %263 = vdwg.mxu0
    %264 = vrot.lane.b32.xlu0 %v141, 120
    %v265 = vpop.permute.xlu0 %264
    %266 = vrot.lane.b32.xlu0 %v141, 88
    %v267 = vpop.permute.xlu0 %266
    %v269 = vsel %vm145, %v265, 0
    %v272 = vsel %vm145, %v267, 0
    %274 = vmatprep.subr.bf16.mxu0 0
    %275 = vmatpush1.bf16.xpose.msra.mxu0 0
    %276 = vmatprep.subr.bf16.mxu0 0
    %277 = vmatpush1.bf16.xpose.msra.mxu0 0
    %278 = vmatprep.subr.bf16.mxu0 0
    %279 = vmatpush1.bf16.xpose.msra.mxu0 0
    %280 = vmatprep.subr.bf16.mxu0 0
    %281 = vmatpush1.bf16.xpose.msra.mxu0 0
    %282 = vmatprep.subr.bf16.mxu0 0
    %283 = vmatpush1.bf16.xpose.msra.mxu0 0
    %284 = vmatprep.subr.bf16.mxu0 0
    %285 = vmatpush1.bf16.xpose.msra.mxu0 0
    %286 = vmatprep.subr.bf16.mxu0 0
    %287 = vmatpush1.bf16.xpose.msra.mxu0 0
    %288 = vmatprep.subr.bf16.mxu0 0
    %289 = vmatpush1.bf16.xpose.msra.mxu0 %v272
    %290 = vmatprep.subr.bf16.mxu0 0
    %291 = vmatpush2.bf16.xpose.msra.mxu0 0
    %292 = vmatprep.subr.bf16.mxu0 0
    %293 = vmatpush2.bf16.xpose.msra.mxu0 0
    %294 = vmatprep.subr.bf16.mxu0 0
    %295 = vmatpush2.bf16.xpose.msra.mxu0 0
    %296 = vmatprep.subr.bf16.mxu0 0
    %297 = vmatpush2.bf16.xpose.msra.mxu0 0
    %298 = vmatprep.subr.bf16.mxu0 0
    %299 = vmatpush2.bf16.xpose.msra.mxu0 0
    %300 = vmatprep.subr.bf16.mxu0 0
    %301 = vmatpush2.bf16.xpose.msra.mxu0 0
    %302 = vmatprep.subr.bf16.mxu0 0
    %303 = vmatpush2.bf16.xpose.msra.mxu0 0
    %304 = vmatprep.subr.bf16.mxu0 0
    %305 = vmatpush2.bf16.xpose.msra.mxu0 0
    %306 = vmatprep.mubr.bf16.mxu0 0
    %307 = vmatmul.mubr.bf16.gmra.mxu0 %v269
    %v308 = vpop.f32.mrf.mxu0
    %v309 = vadd.f32 %v28, %v308
    %v310 = vpop.f32.mrf.mxu0
    %v311 = vpop.f32.mrf.mxu0
    %v312 = vadd.f32 %v29, %v311
    %v313 = vpop.f32.mrf.mxu0
    %314 = vdwg.mxu0
    %v315 = vsel %vm193, %v309, -inf
    %316 = vmax.xlane.f32.xlu0 %v315
    %v317 = vpop.xlane.xlu0 %316
    %v318 = vsel %vm193, %v312, -inf
    %319 = vmax.xlane.f32.xlu0 %v318
    %v320 = vpop.xlane.xlu0 %319
    %v321 = vsub.f32 %v309, %v317
    %v322 = vsub.f32 %v312, %v320
    %v323 = vmul.f32 %v321, 1.442695
    %v324 = vpow.pop %v323
    %v325 = vmul.f32 %v322, 1.442695
    %v326 = vpow.pop %v325
    %v327 = vsel %vm193, %v324, 0.0
    %328 = vadd.xlane.f32.xlu0 %v327
    %v329 = vpop.xlane.xlu0 %328
    %v330 = vsel %vm193, %v326, 0.0
    %331 = vadd.xlane.f32.xlu0 %v330
    %v332 = vpop.xlane.xlu0 %331
    %v333 = vrcp.pop %v329
    %v334 = vrcp.pop %v332
    %v335 = vmul.f32 %v324, %v333
    %v336 = vmul.f32 %v326, %v334
    %v337 = vpack.c.bf16 %v336, %v335
    %338 = vrot.lane.b32.xlu0 %v141, 56
    %v339 = vpop.permute.xlu0 %338
    %v342 = vsel %vm193, %v337, 0
    %344 = vmatprep.subr.bf16.mxu0 0
    %345 = vmatpush1.bf16.msra.mxu0 0
    %346 = vmatprep.subr.bf16.mxu0 0
    %347 = vmatpush1.bf16.msra.mxu0 0
    %348 = vmatprep.subr.bf16.mxu0 0
    %349 = vmatpush1.bf16.msra.mxu0 0
    %350 = vmatprep.subr.bf16.mxu0 0
    %351 = vmatpush1.bf16.msra.mxu0 0
    %352 = vmatprep.subr.bf16.mxu0 0
    %353 = vmatpush1.bf16.msra.mxu0 0
    %354 = vmatprep.subr.bf16.mxu0 0
    %355 = vmatpush1.bf16.msra.mxu0 0
    %356 = vmatprep.subr.bf16.mxu0 0
    %357 = vmatpush1.bf16.msra.mxu0 0
    %358 = vmatprep.subr.bf16.mxu0 0
    %359 = vmatpush1.bf16.msra.mxu0 %v339
    %360 = vmatprep.subr.bf16.mxu0 0
    %361 = vmatpush2.bf16.msra.mxu0 0
    %362 = vmatprep.subr.bf16.mxu0 0
    %363 = vmatpush2.bf16.msra.mxu0 0
    %364 = vmatprep.subr.bf16.mxu0 0
    %365 = vmatpush2.bf16.msra.mxu0 0
    %366 = vmatprep.subr.bf16.mxu0 0
    %367 = vmatpush2.bf16.msra.mxu0 0
    %368 = vmatprep.subr.bf16.mxu0 0
    %369 = vmatpush2.bf16.msra.mxu0 0
    %370 = vmatprep.subr.bf16.mxu0 0
    %371 = vmatpush2.bf16.msra.mxu0 0
    %372 = vmatprep.subr.bf16.mxu0 0
    %373 = vmatpush2.bf16.msra.mxu0 0
    %374 = vmatprep.subr.bf16.mxu0 0
    %375 = vmatpush2.bf16.msra.mxu0 0
    %376 = vmatprep.mubr.bf16.mxu0 0
    %377 = vmatmul.mubr.bf16.gmra.mxu0 %v342
    %v378 = vpop.f32.mrf.mxu0
    %v379 = vadd.f32 0.0, %v378
    %v380 = vpop.f32.mrf.mxu0
    %v381 = vpop.f32.mrf.mxu0
    %v382 = vadd.f32 0.0, %v381
    %v383 = vpop.f32.mrf.mxu0
    %384 = vdwg.mxu0
    %385 = vrot.lane.b32.xlu0 %v141, 112
    %v386 = vpop.permute.xlu0 %385
    %387 = vrot.lane.b32.xlu0 %v141, 80
    %v388 = vpop.permute.xlu0 %387
    %v390 = vsel %vm145, %v386, 0
    %v393 = vsel %vm145, %v388, 0
    %395 = vmatprep.subr.bf16.mxu0 0
    %396 = vmatpush1.bf16.xpose.msra.mxu0 0
    %397 = vmatprep.subr.bf16.mxu0 0
    %398 = vmatpush1.bf16.xpose.msra.mxu0 0
    %399 = vmatprep.subr.bf16.mxu0 0
    %400 = vmatpush1.bf16.xpose.msra.mxu0 0
    %401 = vmatprep.subr.bf16.mxu0 0
    %402 = vmatpush1.bf16.xpose.msra.mxu0 0
    %403 = vmatprep.subr.bf16.mxu0 0
    %404 = vmatpush1.bf16.xpose.msra.mxu0 0
    %405 = vmatprep.subr.bf16.mxu0 0
    %406 = vmatpush1.bf16.xpose.msra.mxu0 0
    %407 = vmatprep.subr.bf16.mxu0 0
    %408 = vmatpush1.bf16.xpose.msra.mxu0 0
    %409 = vmatprep.subr.bf16.mxu0 0
    %410 = vmatpush1.bf16.xpose.msra.mxu0 %v393
    %411 = vmatprep.subr.bf16.mxu0 0
    %412 = vmatpush2.bf16.xpose.msra.mxu0 0
    %413 = vmatprep.subr.bf16.mxu0 0
    %414 = vmatpush2.bf16.xpose.msra.mxu0 0
    %415 = vmatprep.subr.bf16.mxu0 0
    %416 = vmatpush2.bf16.xpose.msra.mxu0 0
    %417 = vmatprep.subr.bf16.mxu0 0
    %418 = vmatpush2.bf16.xpose.msra.mxu0 0
    %419 = vmatprep.subr.bf16.mxu0 0
    %420 = vmatpush2.bf16.xpose.msra.mxu0 0
    %421 = vmatprep.subr.bf16.mxu0 0
    %422 = vmatpush2.bf16.xpose.msra.mxu0 0
    %423 = vmatprep.subr.bf16.mxu0 0
    %424 = vmatpush2.bf16.xpose.msra.mxu0 0
    %425 = vmatprep.subr.bf16.mxu0 0
    %426 = vmatpush2.bf16.xpose.msra.mxu0 0
    %427 = vmatprep.mubr.bf16.mxu0 0
    %428 = vmatmul.mubr.bf16.gmra.mxu0 %v390
    %v429 = vpop.f32.mrf.mxu0
    %v430 = vadd.f32 %v28, %v429
    %v431 = vpop.f32.mrf.mxu0
    %v432 = vpop.f32.mrf.mxu0
    %v433 = vadd.f32 %v29, %v432
    %v434 = vpop.f32.mrf.mxu0
    %435 = vdwg.mxu0
    %v436 = vsel %vm193, %v430, -inf
    %437 = vmax.xlane.f32.xlu0 %v436
    %v438 = vpop.xlane.xlu0 %437
    %v439 = vsel %vm193, %v433, -inf
    %440 = vmax.xlane.f32.xlu0 %v439
    %v441 = vpop.xlane.xlu0 %440
    %v442 = vsub.f32 %v430, %v438
    %v443 = vsub.f32 %v433, %v441
    %v444 = vmul.f32 %v442, 1.442695
    %v445 = vpow.pop %v444
    %v446 = vmul.f32 %v443, 1.442695
    %v447 = vpow.pop %v446
    %v448 = vsel %vm193, %v445, 0.0
    %449 = vadd.xlane.f32.xlu0 %v448
    %v450 = vpop.xlane.xlu0 %449
    %v451 = vsel %vm193, %v447, 0.0
    %452 = vadd.xlane.f32.xlu0 %v451
    %v453 = vpop.xlane.xlu0 %452
    %v454 = vrcp.pop %v450
    %v455 = vrcp.pop %v453
    %v456 = vmul.f32 %v445, %v454
    %v457 = vmul.f32 %v447, %v455
    %v458 = vpack.c.bf16 %v457, %v456
    %459 = vrot.lane.b32.xlu0 %v141, 48
    %v460 = vpop.permute.xlu0 %459
    %v463 = vsel %vm193, %v458, 0
    %465 = vmatprep.subr.bf16.mxu0 0
    %466 = vmatpush1.bf16.msra.mxu0 0
    %467 = vmatprep.subr.bf16.mxu0 0
    %468 = vmatpush1.bf16.msra.mxu0 0
    %469 = vmatprep.subr.bf16.mxu0 0
    %470 = vmatpush1.bf16.msra.mxu0 0
    %471 = vmatprep.subr.bf16.mxu0 0
    %472 = vmatpush1.bf16.msra.mxu0 0
    %473 = vmatprep.subr.bf16.mxu0 0
    %474 = vmatpush1.bf16.msra.mxu0 0
    %475 = vmatprep.subr.bf16.mxu0 0
    %476 = vmatpush1.bf16.msra.mxu0 0
    %477 = vmatprep.subr.bf16.mxu0 0
    %478 = vmatpush1.bf16.msra.mxu0 0
    %479 = vmatprep.subr.bf16.mxu0 0
    %480 = vmatpush1.bf16.msra.mxu0 %v460
    %481 = vmatprep.subr.bf16.mxu0 0
    %482 = vmatpush2.bf16.msra.mxu0 0
    %483 = vmatprep.subr.bf16.mxu0 0
    %484 = vmatpush2.bf16.msra.mxu0 0
    %485 = vmatprep.subr.bf16.mxu0 0
    %486 = vmatpush2.bf16.msra.mxu0 0
    %487 = vmatprep.subr.bf16.mxu0 0
    %488 = vmatpush2.bf16.msra.mxu0 0
    %489 = vmatprep.subr.bf16.mxu0 0
    %490 = vmatpush2.bf16.msra.mxu0 0
    %491 = vmatprep.subr.bf16.mxu0 0
    %492 = vmatpush2.bf16.msra.mxu0 0
    %493 = vmatprep.subr.bf16.mxu0 0
    %494 = vmatpush2.bf16.msra.mxu0 0
    %495 = vmatprep.subr.bf16.mxu0 0
    %496 = vmatpush2.bf16.msra.mxu0 0
    %497 = vmatprep.mubr.bf16.mxu0 0
    %498 = vmatmul.mubr.bf16.gmra.mxu0 %v463
    %v499 = vpop.f32.mrf.mxu0
    %v500 = vadd.f32 0.0, %v499
    %v501 = vpop.f32.mrf.mxu0
    %v502 = vpop.f32.mrf.mxu0
    %v503 = vadd.f32 0.0, %v502
    %v504 = vpop.f32.mrf.mxu0
    %505 = vdwg.mxu0
    %506 = vrot.lane.b32.xlu0 %v141, 104
    %v507 = vpop.permute.xlu0 %506
    %508 = vrot.lane.b32.xlu0 %v141, 72
    %v509 = vpop.permute.xlu0 %508
    %v511 = vsel %vm145, %v507, 0
    %v514 = vsel %vm145, %v509, 0
    %516 = vmatprep.subr.bf16.mxu0 0
    %517 = vmatpush1.bf16.xpose.msra.mxu0 0
    %518 = vmatprep.subr.bf16.mxu0 0
    %519 = vmatpush1.bf16.xpose.msra.mxu0 0
    %520 = vmatprep.subr.bf16.mxu0 0
    %521 = vmatpush1.bf16.xpose.msra.mxu0 0
    %522 = vmatprep.subr.bf16.mxu0 0
    %523 = vmatpush1.bf16.xpose.msra.mxu0 0
    %524 = vmatprep.subr.bf16.mxu0 0
    %525 = vmatpush1.bf16.xpose.msra.mxu0 0
    %526 = vmatprep.subr.bf16.mxu0 0
    %527 = vmatpush1.bf16.xpose.msra.mxu0 0
    %528 = vmatprep.subr.bf16.mxu0 0
    %529 = vmatpush1.bf16.xpose.msra.mxu0 0
    %530 = vmatprep.subr.bf16.mxu0 0
    %531 = vmatpush1.bf16.xpose.msra.mxu0 %v514
    %532 = vmatprep.subr.bf16.mxu0 0
    %533 = vmatpush2.bf16.xpose.msra.mxu0 0
    %534 = vmatprep.subr.bf16.mxu0 0
    %535 = vmatpush2.bf16.xpose.msra.mxu0 0
    %536 = vmatprep.subr.bf16.mxu0 0
    %537 = vmatpush2.bf16.xpose.msra.mxu0 0
    %538 = vmatprep.subr.bf16.mxu0 0
    %539 = vmatpush2.bf16.xpose.msra.mxu0 0
    %540 = vmatprep.subr.bf16.mxu0 0
    %541 = vmatpush2.bf16.xpose.msra.mxu0 0
    %542 = vmatprep.subr.bf16.mxu0 0
    %543 = vmatpush2.bf16.xpose.msra.mxu0 0
    %544 = vmatprep.subr.bf16.mxu0 0
    %545 = vmatpush2.bf16.xpose.msra.mxu0 0
    %546 = vmatprep.subr.bf16.mxu0 0
    %547 = vmatpush2.bf16.xpose.msra.mxu0 0
    %548 = vmatprep.mubr.bf16.mxu0 0
    %549 = vmatmul.mubr.bf16.gmra.mxu0 %v511
    %v550 = vpop.f32.mrf.mxu0
    %v551 = vadd.f32 %v28, %v550
    %v552 = vpop.f32.mrf.mxu0
    %v553 = vpop.f32.mrf.mxu0
    %v554 = vadd.f32 %v29, %v553
    %v555 = vpop.f32.mrf.mxu0
    %556 = vdwg.mxu0
    %v557 = vsel %vm193, %v551, -inf
    %558 = vmax.xlane.f32.xlu0 %v557
    %v559 = vpop.xlane.xlu0 %558
    %v560 = vsel %vm193, %v554, -inf
    %561 = vmax.xlane.f32.xlu0 %v560
    %v562 = vpop.xlane.xlu0 %561
    %v563 = vsub.f32 %v551, %v559
    %v564 = vsub.f32 %v554, %v562
    %v565 = vmul.f32 %v563, 1.442695
    %v566 = vpow.pop %v565
    %v567 = vmul.f32 %v564, 1.442695
    %v568 = vpow.pop %v567
    %v569 = vsel %vm193, %v566, 0.0
    %570 = vadd.xlane.f32.xlu0 %v569
    %v571 = vpop.xlane.xlu0 %570
    %v572 = vsel %vm193, %v568, 0.0
    %573 = vadd.xlane.f32.xlu0 %v572
    %v574 = vpop.xlane.xlu0 %573
    %v575 = vrcp.pop %v571
    %v576 = vrcp.pop %v574
    %v577 = vmul.f32 %v566, %v575
    %v578 = vmul.f32 %v568, %v576
    %v579 = vpack.c.bf16 %v578, %v577
    %580 = vrot.lane.b32.xlu0 %v141, 40
    %v581 = vpop.permute.xlu0 %580
    %v584 = vsel %vm193, %v579, 0
    %586 = vmatprep.subr.bf16.mxu0 0
    %587 = vmatpush1.bf16.msra.mxu0 0
    %588 = vmatprep.subr.bf16.mxu0 0
    %589 = vmatpush1.bf16.msra.mxu0 0
    %590 = vmatprep.subr.bf16.mxu0 0
    %591 = vmatpush1.bf16.msra.mxu0 0
    %592 = vmatprep.subr.bf16.mxu0 0
    %593 = vmatpush1.bf16.msra.mxu0 0
    %594 = vmatprep.subr.bf16.mxu0 0
    %595 = vmatpush1.bf16.msra.mxu0 0
    %596 = vmatprep.subr.bf16.mxu0 0
    %597 = vmatpush1.bf16.msra.mxu0 0
    %598 = vmatprep.subr.bf16.mxu0 0
    %599 = vmatpush1.bf16.msra.mxu0 0
    %600 = vmatprep.subr.bf16.mxu0 0
    %601 = vmatpush1.bf16.msra.mxu0 %v581
    %602 = vmatprep.subr.bf16.mxu0 0
    %603 = vmatpush2.bf16.msra.mxu0 0
    %604 = vmatprep.subr.bf16.mxu0 0
    %605 = vmatpush2.bf16.msra.mxu0 0
    %606 = vmatprep.subr.bf16.mxu0 0
    %607 = vmatpush2.bf16.msra.mxu0 0
    %608 = vmatprep.subr.bf16.mxu0 0
    %609 = vmatpush2.bf16.msra.mxu0 0
    %610 = vmatprep.subr.bf16.mxu0 0
    %611 = vmatpush2.bf16.msra.mxu0 0
    %612 = vmatprep.subr.bf16.mxu0 0
    %613 = vmatpush2.bf16.msra.mxu0 0
    %614 = vmatprep.subr.bf16.mxu0 0
    %615 = vmatpush2.bf16.msra.mxu0 0
    %616 = vmatprep.subr.bf16.mxu0 0
    %617 = vmatpush2.bf16.msra.mxu0 0
    %618 = vmatprep.mubr.bf16.mxu0 0
    %619 = vmatmul.mubr.bf16.gmra.mxu0 %v584
    %v620 = vpop.f32.mrf.mxu0
    %v621 = vadd.f32 0.0, %v620
    %v622 = vpop.f32.mrf.mxu0
    %v623 = vpop.f32.mrf.mxu0
    %v624 = vadd.f32 0.0, %v623
    %v625 = vpop.f32.mrf.mxu0
    %626 = vdwg.mxu0
    %629 = vrot.lane.b32.xlu0 %v379, 8
    %v630 = vpop.permute.xlu0 %629
    %631 = vrot.lane.b32.xlu0 %v382, 8
    %v632 = vpop.permute.xlu0 %631
    %637 = vrot.lane.b32.xlu0 %v500, 16
    %v638 = vpop.permute.xlu0 %637
    %639 = vrot.lane.b32.xlu0 %v503, 16
    %v640 = vpop.permute.xlu0 %639
    %645 = vrot.lane.b32.xlu0 %v621, 24
    %v646 = vpop.permute.xlu0 %645
    %647 = vrot.lane.b32.xlu0 %v624, 24
    %v648 = vpop.permute.xlu0 %647
    %v651 = vsel %vm145, %v258, %v630
    %v652 = vsel %vm145, %v261, %v632
    %v653 = vsel %vm193, %v651, %v638
    %v654 = vsel %vm193, %v652, %v640
    %vm655 = vcmask 195584
    %v656 = vsel %vm655, %v653, %v646
    %v657 = vsel %vm655, %v654, %v648
    %v658 = vpack.c.bf16 %v657, %v656
    %v659 = vld [vmem:[%s3] sm:$0xf]
    %v660 = vld [vmem:[%s3 + $0x4] sm:$0xf]
    %v661 = vld [vmem:[%s3 + $0x8] sm:$0xf]
    %v662 = vld [vmem:[%s3 + $0xc] sm:$0xf]
    %v667 = vunpack.c.l.b16 %v659
    %v668 = vunpack.c.l.b16 %v660
    %v669 = vunpack.c.l.b16 %v661
    %v670 = vunpack.c.l.b16 %v662
    %v671 = vpack.c.b16 %v668, %v667
    %v672 = vpack.c.b16 %v670, %v669
    %676 = vrot.lane.b32.xlu0 %v84, 32
    %v677 = vpop.permute.xlu0 %676
    %v680 = vsel %vm33, %v658, 0
    %682 = vmatprep.subr.bf16.mxu0 0
    %683 = vmatpush1.bf16.msra.mxu0 0
    %684 = vmatprep.subr.bf16.mxu0 0
    %685 = vmatpush1.bf16.msra.mxu0 0
    %686 = vmatprep.subr.bf16.mxu0 0
    %687 = vmatpush1.bf16.msra.mxu0 0
    %688 = vmatprep.subr.bf16.mxu0 0
    %689 = vmatpush1.bf16.msra.mxu0 0
    %690 = vmatprep.subr.bf16.mxu0 0
    %691 = vmatpush1.bf16.msra.mxu0 0
    %692 = vmatprep.subr.bf16.mxu0 0
    %693 = vmatpush1.bf16.msra.mxu0 0
    %694 = vmatprep.subr.bf16.mxu0 0
    %695 = vmatpush1.bf16.msra.mxu0 %v672
    %696 = vmatprep.subr.bf16.mxu0 0
    %697 = vmatpush1.bf16.msra.mxu0 %v671
    %698 = vmatprep.subr.bf16.mxu0 0
    %699 = vmatpush2.bf16.msra.mxu0 0
    %700 = vmatprep.subr.bf16.mxu0 0
    %701 = vmatpush2.bf16.msra.mxu0 0
    %702 = vmatprep.subr.bf16.mxu0 0
    %703 = vmatpush2.bf16.msra.mxu0 0
    %704 = vmatprep.subr.bf16.mxu0 0
    %705 = vmatpush2.bf16.msra.mxu0 0
    %706 = vmatprep.subr.bf16.mxu0 0
    %707 = vmatpush2.bf16.msra.mxu0 0
    %708 = vmatprep.subr.bf16.mxu0 0
    %709 = vmatpush2.bf16.msra.mxu0 0
    %710 = vmatprep.subr.bf16.mxu0 0
    %711 = vmatpush2.bf16.msra.mxu0 0
    %712 = vmatprep.subr.bf16.mxu0 0
    %713 = vmatpush2.bf16.msra.mxu0 0
    %714 = vmatprep.mubr.bf16.mxu0 0
    %715 = vmatmul.mubr.bf16.gmra.mxu0 %v680
    %v716 = vpop.f32.mrf.mxu0
    %v717 = vadd.f32 %v677, %v716
    %v718 = vpop.f32.mrf.mxu0
    %v719 = vpop.f32.mrf.mxu0
    %v720 = vadd.f32 %v677, %v719
    %v721 = vpop.f32.mrf.mxu0
    %722 = vdwg.mxu0
    %v723 = vadd.f32 %v71, %v717
    %v724 = vadd.f32 %v72, %v720
    %v725 = vsel %vm33, %v723, 0.0
    %726 = vadd.xlane.f32.xlu0 %v725
    %v727 = vpop.xlane.xlu0 %726
    %v728 = vsel %vm33, %v724, 0.0
    %729 = vadd.xlane.f32.xlu0 %v728
    %v730 = vpop.xlane.xlu0 %729
    %v731 = vmul.f32 %v727, %v40
    %v732 = vmul.f32 %v730, %v40
    %v733 = vsub.f32 %v723, %v731
    %v734 = vsub.f32 %v724, %v732
    %v735 = vmul.f32 %v733, %v733
    %v736 = vmul.f32 %v734, %v734
    %v737 = vsel %vm33, %v735, 0.0
    %738 = vadd.xlane.f32.xlu0 %v737
    %v739 = vpop.xlane.xlu0 %738
    %v740 = vsel %vm33, %v736, 0.0
    %741 = vadd.xlane.f32.xlu0 %v740
    %v742 = vpop.xlane.xlu0 %741
    %v743 = vmul.f32 %v739, %v40
    %v744 = vmul.f32 %v742, %v40
    %v745 = vadd.f32 %v743, 1e-12
    %v746 = vadd.f32 %v744, 1e-12
    %v747 = vrsqrt.pop %v745
    %v748 = vrsqrt.pop %v746
    %v749 = vmul.f32 %v733, %v747
    %v750 = vmul.f32 %v734, %v748
    %v751 = vlaneseq
    %v752 = vshrl.u32 %v751, 7
    %v753 = vsub.s32 0, %v752
    %v754 = vrot.slane %v74, %v753
    %756 = vrot.lane.b32.xlu0 %v754, 32
    %v757 = vpop.permute.xlu0 %756
    %v759 = vmul.f32 %v749, %v757
    %v760 = vmul.f32 %v750, %v757
    %v761 = vlaneseq
    %v762 = vshrl.u32 %v761, 7
    %v763 = vsub.s32 0, %v762
    %v764 = vrot.slane %v75, %v763
    %v765 = vadd.f32 %v759, %v764
    %v766 = vadd.f32 %v760, %v764
    %v767 = vpack.c.bf16 %v766, %v765
    %v768 = vld [vmem:[%s4] sm:$0xf]
    %v769 = vld [vmem:[%s4 + $0x4] sm:$0xf]
    %v770 = vld [vmem:[%s4 + $0x8] sm:$0xf]
    %v771 = vld [vmem:[%s4 + $0xc] sm:$0xf]
    %v776 = vunpack.c.l.b16 %v768
    %v777 = vunpack.c.l.b16 %v769
    %v778 = vunpack.c.l.b16 %v770
    %v779 = vunpack.c.l.b16 %v771
    %v780 = vpack.c.b16 %v777, %v776
    %v781 = vpack.c.b16 %v779, %v778
    %v785 = vsel %vm33, %v767, 0
    %787 = vmatprep.subr.bf16.mxu0 0
    %788 = vmatpush1.bf16.msra.mxu0 0
    %789 = vmatprep.subr.bf16.mxu0 0
    %790 = vmatpush1.bf16.msra.mxu0 0
    %791 = vmatprep.subr.bf16.mxu0 0
    %792 = vmatpush1.bf16.msra.mxu0 0
    %793 = vmatprep.subr.bf16.mxu0 0
    %794 = vmatpush1.bf16.msra.mxu0 0
    %795 = vmatprep.subr.bf16.mxu0 0
    %796 = vmatpush1.bf16.msra.mxu0 0
    %797 = vmatprep.subr.bf16.mxu0 0
    %798 = vmatpush1.bf16.msra.mxu0 0
    %799 = vmatprep.subr.bf16.mxu0 0
    %800 = vmatpush1.bf16.msra.mxu0 %v781
    %801 = vmatprep.subr.bf16.mxu0 0
    %802 = vmatpush1.bf16.msra.mxu0 %v780
    %803 = vmatprep.subr.bf16.mxu0 0
    %804 = vmatpush2.bf16.msra.mxu0 0
    %805 = vmatprep.subr.bf16.mxu0 0
    %806 = vmatpush2.bf16.msra.mxu0 0
    %807 = vmatprep.subr.bf16.mxu0 0
    %808 = vmatpush2.bf16.msra.mxu0 0
    %809 = vmatprep.subr.bf16.mxu0 0
    %810 = vmatpush2.bf16.msra.mxu0 0
    %811 = vmatprep.subr.bf16.mxu0 0
    %812 = vmatpush2.bf16.msra.mxu0 0
    %813 = vmatprep.subr.bf16.mxu0 0
    %814 = vmatpush2.bf16.msra.mxu0 0
    %815 = vmatprep.subr.bf16.mxu0 0
    %816 = vmatpush2.bf16.msra.mxu0 0
    %817 = vmatprep.subr.bf16.mxu0 0
    %818 = vmatpush2.bf16.msra.mxu0 0
    %819 = vmatprep.mubr.bf16.mxu0 0
    %820 = vmatmul.mubr.bf16.gmra.mxu0 %v785
    %v821 = vpop.f32.mrf.mxu0
    %v822 = vadd.f32 %v754, %v821
    %v823 = vpop.f32.mrf.mxu0
    %v824 = vpop.f32.mrf.mxu0
    %v825 = vadd.f32 %v754, %v824
    %v826 = vpop.f32.mrf.mxu0
    %827 = vdwg.mxu0
    %v828 = vmul.f32 %v822, 0.5
    %v829 = vmul.f32 %v825, 0.5
    %v830 = vmul.f32 %v822, 0.044715
    %v831 = vmul.f32 %v825, 0.044715
    %v832 = vmul.f32 %v830, %v822
    %v833 = vmul.f32 %v831, %v825
    %v834 = vmul.f32 %v832, %v822
    %v835 = vmul.f32 %v833, %v825
    %v836 = vadd.f32 %v822, %v834
    %v837 = vadd.f32 %v825, %v835
    %v838 = vmul.f32 %v836, 0.7978846
    %v839 = vmul.f32 %v837, 0.7978846
    %v840 = vtanh.pop %v838
    %v841 = vtanh.pop %v839
    %v842 = vadd.f32 %v840, 1.0
    %v843 = vadd.f32 %v841, 1.0
    %v844 = vmul.f32 %v828, %v842
    %v845 = vmul.f32 %v829, %v843
    %v846 = vpack.c.bf16 %v845, %v844
    %v847 = vld [vmem:[%s5] sm:$0xf]
    %v848 = vld [vmem:[%s5 + $0x4] sm:$0xf]
    %v849 = vld [vmem:[%s5 + $0x8] sm:$0xf]
    %v850 = vld [vmem:[%s5 + $0xc] sm:$0xf]
    %v851 = vld [vmem:[%s5 + $0x10] sm:$0xf]
    %v852 = vld [vmem:[%s5 + $0x14] sm:$0xf]
    %v853 = vld [vmem:[%s5 + $0x18] sm:$0xf]
    %v854 = vld [vmem:[%s5 + $0x1c] sm:$0xf]
    %v863 = vunpack.c.l.b16 %v847
    %v864 = vunpack.c.l.b16 %v848
    %v865 = vunpack.c.l.b16 %v849
    %v866 = vunpack.c.l.b16 %v850
    %v867 = vunpack.c.l.b16 %v851
    %v868 = vunpack.c.l.b16 %v852
    %v869 = vunpack.c.l.b16 %v853
    %v870 = vunpack.c.l.b16 %v854
    %v871 = vpack.c.b16 %v864, %v863
    %v872 = vpack.c.b16 %v866, %v865
    %v873 = vpack.c.b16 %v868, %v867
    %v874 = vpack.c.b16 %v870, %v869
    %879 = vrot.lane.b32.xlu0 %v754, 64
    %v880 = vpop.permute.xlu0 %879
    %vm882 = vcmask 523264
    %v884 = vsel %vm882, %v846, 0
    %886 = vmatprep.subr.bf16.mxu0 0
    %887 = vmatpush1.bf16.msra.mxu0 0
    %888 = vmatprep.subr.bf16.mxu0 0
    %889 = vmatpush1.bf16.msra.mxu0 0
    %890 = vmatprep.subr.bf16.mxu0 0
    %891 = vmatpush1.bf16.msra.mxu0 0
    %892 = vmatprep.subr.bf16.mxu0 0
    %893 = vmatpush1.bf16.msra.mxu0 0
    %894 = vmatprep.subr.bf16.mxu0 0
    %895 = vmatpush1.bf16.msra.mxu0 %v874
    %896 = vmatprep.subr.bf16.mxu0 0
    %897 = vmatpush1.bf16.msra.mxu0 %v873
    %898 = vmatprep.subr.bf16.mxu0 0
    %899 = vmatpush1.bf16.msra.mxu0 %v872
    %900 = vmatprep.subr.bf16.mxu0 0
    %901 = vmatpush1.bf16.msra.mxu0 %v871
    %902 = vmatprep.subr.bf16.mxu0 0
    %903 = vmatpush2.bf16.msra.mxu0 0
    %904 = vmatprep.subr.bf16.mxu0 0
    %905 = vmatpush2.bf16.msra.mxu0 0
    %906 = vmatprep.subr.bf16.mxu0 0
    %907 = vmatpush2.bf16.msra.mxu0 0
    %908 = vmatprep.subr.bf16.mxu0 0
    %909 = vmatpush2.bf16.msra.mxu0 0
    %910 = vmatprep.subr.bf16.mxu0 0
    %911 = vmatpush2.bf16.msra.mxu0 0
    %912 = vmatprep.subr.bf16.mxu0 0
    %913 = vmatpush2.bf16.msra.mxu0 0
    %914 = vmatprep.subr.bf16.mxu0 0
    %915 = vmatpush2.bf16.msra.mxu0 0
    %916 = vmatprep.subr.bf16.mxu0 0
    %917 = vmatpush2.bf16.msra.mxu0 0
    %918 = vmatprep.mubr.bf16.mxu0 0
    %919 = vmatmul.mubr.bf16.gmra.mxu0 %v884
    %v920 = vpop.f32.mrf.mxu0
    %v921 = vadd.f32 %v880, %v920
    %v922 = vpop.f32.mrf.mxu0
    %v923 = vpop.f32.mrf.mxu0
    %v924 = vadd.f32 %v880, %v923
    %v925 = vpop.f32.mrf.mxu0
    %926 = vdwg.mxu0
    %v927 = vadd.f32 %v765, %v921
    %v928 = vadd.f32 %v766, %v924
    %v929 = vsel %vm33, %v927, 0.0
    %930 = vadd.xlane.f32.xlu0 %v929
    %v931 = vpop.xlane.xlu0 %930
    %v932 = vsel %vm33, %v928, 0.0
    %933 = vadd.xlane.f32.xlu0 %v932
    %v934 = vpop.xlane.xlu0 %933
    %v935 = vmul.f32 %v931, %v40
    %v936 = vmul.f32 %v934, %v40
    %v937 = vsub.f32 %v927, %v935
    %v938 = vsub.f32 %v928, %v936
    %v939 = vmul.f32 %v937, %v937
    %v940 = vmul.f32 %v938, %v938
    %v941 = vsel %vm33, %v939, 0.0
    %942 = vadd.xlane.f32.xlu0 %v941
    %v943 = vpop.xlane.xlu0 %942
    %v944 = vsel %vm33, %v940, 0.0
    %945 = vadd.xlane.f32.xlu0 %v944
    %v946 = vpop.xlane.xlu0 %945
    %v947 = vmul.f32 %v943, %v40
    %v948 = vmul.f32 %v946, %v40
    %v949 = vadd.f32 %v947, 1e-12
    %v950 = vadd.f32 %v948, 1e-12
    %v951 = vrsqrt.pop %v949
    %v952 = vrsqrt.pop %v950
    %v953 = vmul.f32 %v937, %v951
    %v954 = vmul.f32 %v938, %v952
    %956 = vrot.lane.b32.xlu0 %v764, 96
    %v957 = vpop.permute.xlu0 %956
    %v959 = vmul.f32 %v953, %v957
    %v960 = vmul.f32 %v954, %v957
    %961 = vrot.lane.b32.xlu0 %v764, 64
    %v962 = vpop.permute.xlu0 %961
    %v964 = vadd.f32 %v959, %v962
    %v965 = vadd.f32 %v960, %v962
    %v966 = vld [vmem:[%s6 + $0x1] sm:$0x1]
    %v967 = vld [vmem:[%s6 + $0x5] sm:$0x1]
    %v968 = vld [vmem:[%s6 + $0x9] sm:$0x1]
    %v969 = vpack.c.bf16 %v965, %v964
    %s970 = scalar_lea.vmem %s2, 16
    %v971 = vld [vmem:[%s970] sm:$0xf]
    %v972 = vld [vmem:[%s970 + $0x4] sm:$0xf]
    %v973 = vld [vmem:[%s970 + $0x8] sm:$0xf]
    %v974 = vld [vmem:[%s970 + $0xc] sm:$0xf]
    %v975 = vlaneseq
    %v976 = vshrl.u32 %v975, 7
    %v977 = vsub.s32 0, %v976
    %v978 = vrot.slane %v966, %v977
    %v983 = vunpack.c.l.b16 %v971
    %v984 = vunpack.c.l.b16 %v972
    %v985 = vunpack.c.l.b16 %v973
    %v986 = vunpack.c.l.b16 %v974
    %v987 = vpack.c.b16 %v984, %v983
    %v988 = vpack.c.b16 %v986, %v985
    %v992 = vsel %vm33, %v969, 0
    %994 = vmatprep.subr.bf16.mxu0 0
    %995 = vmatpush1.bf16.msra.mxu0 0
    %996 = vmatprep.subr.bf16.mxu0 0
    %997 = vmatpush1.bf16.msra.mxu0 0
    %998 = vmatprep.subr.bf16.mxu0 0
    %999 = vmatpush1.bf16.msra.mxu0 0
    %1000 = vmatprep.subr.bf16.mxu0 0
    %1001 = vmatpush1.bf16.msra.mxu0 0
    %1002 = vmatprep.subr.bf16.mxu0 0
    %1003 = vmatpush1.bf16.msra.mxu0 0
    %1004 = vmatprep.subr.bf16.mxu0 0
    %1005 = vmatpush1.bf16.msra.mxu0 0
    %1006 = vmatprep.subr.bf16.mxu0 0
    %1007 = vmatpush1.bf16.msra.mxu0 %v988
    %1008 = vmatprep.subr.bf16.mxu0 0
    %1009 = vmatpush1.bf16.msra.mxu0 %v987
    %1010 = vmatprep.subr.bf16.mxu0 0
    %1011 = vmatpush2.bf16.msra.mxu0 0
    %1012 = vmatprep.subr.bf16.mxu0 0
    %1013 = vmatpush2.bf16.msra.mxu0 0
    %1014 = vmatprep.subr.bf16.mxu0 0
    %1015 = vmatpush2.bf16.msra.mxu0 0
    %1016 = vmatprep.subr.bf16.mxu0 0
    %1017 = vmatpush2.bf16.msra.mxu0 0
    %1018 = vmatprep.subr.bf16.mxu0 0
    %1019 = vmatpush2.bf16.msra.mxu0 0
    %1020 = vmatprep.subr.bf16.mxu0 0
    %1021 = vmatpush2.bf16.msra.mxu0 0
    %1022 = vmatprep.subr.bf16.mxu0 0
    %1023 = vmatpush2.bf16.msra.mxu0 0
    %1024 = vmatprep.subr.bf16.mxu0 0
    %1025 = vmatpush2.bf16.msra.mxu0 0
    %1026 = vmatprep.mubr.bf16.mxu0 0
    %1027 = vmatmul.mubr.bf16.gmra.mxu0 %v992
    %v1028 = vpop.f32.mrf.mxu0
    %v1029 = vadd.f32 %v978, %v1028
    %v1030 = vpop.f32.mrf.mxu0
    %v1031 = vpop.f32.mrf.mxu0
    %v1032 = vadd.f32 %v978, %v1031
    %v1033 = vpop.f32.mrf.mxu0
    %1034 = vdwg.mxu0
    %v1035 = vpack.c.bf16 %v1032, %v1029
    %1037 = vrot.lane.b32.xlu0 %v1035, 96
    %v1038 = vpop.permute.xlu0 %1037
    %v1040 = vsel %vm145, %v1035, 0
    %v1043 = vsel %vm145, %v1038, 0
    %1045 = vmatprep.subr.bf16.mxu0 0
    %1046 = vmatpush1.bf16.xpose.msra.mxu0 0
    %1047 = vmatprep.subr.bf16.mxu0 0
    %1048 = vmatpush1.bf16.xpose.msra.mxu0 0
    %1049 = vmatprep.subr.bf16.mxu0 0
    %1050 = vmatpush1.bf16.xpose.msra.mxu0 0
    %1051 = vmatprep.subr.bf16.mxu0 0
    %1052 = vmatpush1.bf16.xpose.msra.mxu0 0
    %1053 = vmatprep.subr.bf16.mxu0 0
    %1054 = vmatpush1.bf16.xpose.msra.mxu0 0
    %1055 = vmatprep.subr.bf16.mxu0 0
    %1056 = vmatpush1.bf16.xpose.msra.mxu0 0
    %1057 = vmatprep.subr.bf16.mxu0 0
    %1058 = vmatpush1.bf16.xpose.msra.mxu0 0
    %1059 = vmatprep.subr.bf16.mxu0 0
    %1060 = vmatpush1.bf16.xpose.msra.mxu0 %v1043
    %1061 = vmatprep.subr.bf16.mxu0 0
    %1062 = vmatpush2.bf16.xpose.msra.mxu0 0
    %1063 = vmatprep.subr.bf16.mxu0 0
    %1064 = vmatpush2.bf16.xpose.msra.mxu0 0
    %1065 = vmatprep.subr.bf16.mxu0 0
    %1066 = vmatpush2.bf16.xpose.msra.mxu0 0
    %1067 = vmatprep.subr.bf16.mxu0 0
    %1068 = vmatpush2.bf16.xpose.msra.mxu0 0
    %1069 = vmatprep.subr.bf16.mxu0 0
    %1070 = vmatpush2.bf16.xpose.msra.mxu0 0
    %1071 = vmatprep.subr.bf16.mxu0 0
    %1072 = vmatpush2.bf16.xpose.msra.mxu0 0
    %1073 = vmatprep.subr.bf16.mxu0 0
    %1074 = vmatpush2.bf16.xpose.msra.mxu0 0
    %1075 = vmatprep.subr.bf16.mxu0 0
    %1076 = vmatpush2.bf16.xpose.msra.mxu0 0
    %1077 = vmatprep.mubr.bf16.mxu0 0
    %1078 = vmatmul.mubr.bf16.gmra.mxu0 %v1040
    %v1079 = vpop.f32.mrf.mxu0
    %v1080 = vadd.f32 %v28, %v1079
    %v1081 = vpop.f32.mrf.mxu0
    %v1082 = vpop.f32.mrf.mxu0
    %v1083 = vadd.f32 %v29, %v1082
    %v1084 = vpop.f32.mrf.mxu0
    %1085 = vdwg.mxu0
    %v1086 = vsel %vm193, %v1080, -inf
    %1087 = vmax.xlane.f32.xlu0 %v1086
    %v1088 = vpop.xlane.xlu0 %1087
    %v1089 = vsel %vm193, %v1083, -inf
    %1090 = vmax.xlane.f32.xlu0 %v1089
    %v1091 = vpop.xlane.xlu0 %1090
    %v1092 = vsub.f32 %v1080, %v1088
    %v1093 = vsub.f32 %v1083, %v1091
    %v1094 = vmul.f32 %v1092, 1.442695
    %v1095 = vpow.pop %v1094
    %v1096 = vmul.f32 %v1093, 1.442695
    %v1097 = vpow.pop %v1096
    %v1098 = vsel %vm193, %v1095, 0.0
    %1099 = vadd.xlane.f32.xlu0 %v1098
    %v1100 = vpop.xlane.xlu0 %1099
    %v1101 = vsel %vm193, %v1097, 0.0
    %1102 = vadd.xlane.f32.xlu0 %v1101
    %v1103 = vpop.xlane.xlu0 %1102
    %v1104 = vrcp.pop %v1100
    %v1105 = vrcp.pop %v1103
    %v1106 = vmul.f32 %v1095, %v1104
    %v1107 = vmul.f32 %v1097, %v1105
    %v1108 = vpack.c.bf16 %v1107, %v1106
    %1109 = vrot.lane.b32.xlu0 %v1035, 64
    %v1110 = vpop.permute.xlu0 %1109
    %v1113 = vsel %vm193, %v1108, 0
    %1115 = vmatprep.subr.bf16.mxu0 0
    %1116 = vmatpush1.bf16.msra.mxu0 0
    %1117 = vmatprep.subr.bf16.mxu0 0
    %1118 = vmatpush1.bf16.msra.mxu0 0
    %1119 = vmatprep.subr.bf16.mxu0 0
    %1120 = vmatpush1.bf16.msra.mxu0 0
    %1121 = vmatprep.subr.bf16.mxu0 0
    %1122 = vmatpush1.bf16.msra.mxu0 0
    %1123 = vmatprep.subr.bf16.mxu0 0
    %1124 = vmatpush1.bf16.msra.mxu0 0
    %1125 = vmatprep.subr.bf16.mxu0 0
    %1126 = vmatpush1.bf16.msra.mxu0 0
    %1127 = vmatprep.subr.bf16.mxu0 0
    %1128 = vmatpush1.bf16.msra.mxu0 0
    %1129 = vmatprep.subr.bf16.mxu0 0
    %1130 = vmatpush1.bf16.msra.mxu0 %v1110
    %1131 = vmatprep.subr.bf16.mxu0 0
    %1132 = vmatpush2.bf16.msra.mxu0 0
    %1133 = vmatprep.subr.bf16.mxu0 0
    %1134 = vmatpush2.bf16.msra.mxu0 0
    %1135 = vmatprep.subr.bf16.mxu0 0
    %1136 = vmatpush2.bf16.msra.mxu0 0
    %1137 = vmatprep.subr.bf16.mxu0 0
    %1138 = vmatpush2.bf16.msra.mxu0 0
    %1139 = vmatprep.subr.bf16.mxu0 0
    %1140 = vmatpush2.bf16.msra.mxu0 0
    %1141 = vmatprep.subr.bf16.mxu0 0
    %1142 = vmatpush2.bf16.msra.mxu0 0
    %1143 = vmatprep.subr.bf16.mxu0 0
    %1144 = vmatpush2.bf16.msra.mxu0 0
    %1145 = vmatprep.subr.bf16.mxu0 0
    %1146 = vmatpush2.bf16.msra.mxu0 0
    %1147 = vmatprep.mubr.bf16.mxu0 0
    %1148 = vmatmul.mubr.bf16.gmra.mxu0 %v1113
    %v1149 = vpop.f32.mrf.mxu0
    %v1150 = vadd.f32 0.0, %v1149
    %v1151 = vpop.f32.mrf.mxu0
    %v1152 = vpop.f32.mrf.mxu0
    %v1153 = vadd.f32 0.0, %v1152
    %v1154 = vpop.f32.mrf.mxu0
    %1155 = vdwg.mxu0
    %1156 = vrot.lane.b32.xlu0 %v1035, 120
    %v1157 = vpop.permute.xlu0 %1156
    %1158 = vrot.lane.b32.xlu0 %v1035, 88
    %v1159 = vpop.permute.xlu0 %1158
    %v1161 = vsel %vm145, %v1157, 0
    %v1164 = vsel %vm145, %v1159, 0
    %1166 = vmatprep.subr.bf16.mxu0 0
    %1167 = vmatpush1.bf16.xpose.msra.mxu0 0
    %1168 = vmatprep.subr.bf16.mxu0 0
    %1169 = vmatpush1.bf16.xpose.msra.mxu0 0
    %1170 = vmatprep.subr.bf16.mxu0 0
    %1171 = vmatpush1.bf16.xpose.msra.mxu0 0
    %1172 = vmatprep.subr.bf16.mxu0 0
    %1173 = vmatpush1.bf16.xpose.msra.mxu0 0
    %1174 = vmatprep.subr.bf16.mxu0 0
    %1175 = vmatpush1.bf16.xpose.msra.mxu0 0
    %1176 = vmatprep.subr.bf16.mxu0 0
    %1177 = vmatpush1.bf16.xpose.msra.mxu0 0
    %1178 = vmatprep.subr.bf16.mxu0 0
    %1179 = vmatpush1.bf16.xpose.msra.mxu0 0
    %1180 = vmatprep.subr.bf16.mxu0 0
    %1181 = vmatpush1.bf16.xpose.msra.mxu0 %v1164
    %1182 = vmatprep.subr.bf16.mxu0 0
    %1183 = vmatpush2.bf16.xpose.msra.mxu0 0
    %1184 = vmatprep.subr.bf16.mxu0 0
    %1185 = vmatpush2.bf16.xpose.msra.mxu0 0
    %1186 = vmatprep.subr.bf16.mxu0 0
    %1187 = vmatpush2.bf16.xpose.msra.mxu0 0
    %1188 = vmatprep.subr.bf16.mxu0 0
    %1189 = vmatpush2.bf16.xpose.msra.mxu0 0
    %1190 = vmatprep.subr.bf16.mxu0 0
    %1191 = vmatpush2.bf16.xpose.msra.mxu0 0
    %1192 = vmatprep.subr.bf16.mxu0 0
    %1193 = vmatpush2.bf16.xpose.msra.mxu0 0
    %1194 = vmatprep.subr.bf16.mxu0 0
    %1195 = vmatpush2.bf16.xpose.msra.mxu0 0
    %1196 = vmatprep.subr.bf16.mxu0 0
    %1197 = vmatpush2.bf16.xpose.msra.mxu0 0
    %1198 = vmatprep.mubr.bf16.mxu0 0
    %1199 = vmatmul.mubr.bf16.gmra.mxu0 %v1161
    %v1200 = vpop.f32.mrf.mxu0
    %v1201 = vadd.f32 %v28, %v1200
    %v1202 = vpop.f32.mrf.mxu0
    %v1203 = vpop.f32.mrf.mxu0
    %v1204 = vadd.f32 %v29, %v1203
    %v1205 = vpop.f32.mrf.mxu0
    %1206 = vdwg.mxu0
    %v1207 = vsel %vm193, %v1201, -inf
    %1208 = vmax.xlane.f32.xlu0 %v1207
    %v1209 = vpop.xlane.xlu0 %1208
    %v1210 = vsel %vm193, %v1204, -inf
    %1211 = vmax.xlane.f32.xlu0 %v1210
    %v1212 = vpop.xlane.xlu0 %1211
    %v1213 = vsub.f32 %v1201, %v1209
    %v1214 = vsub.f32 %v1204, %v1212
    %v1215 = vmul.f32 %v1213, 1.442695
    %v1216 = vpow.pop %v1215
    %v1217 = vmul.f32 %v1214, 1.442695
    %v1218 = vpow.pop %v1217
    %v1219 = vsel %vm193, %v1216, 0.0
    %1220 = vadd.xlane.f32.xlu0 %v1219
    %v1221 = vpop.xlane.xlu0 %1220
    %v1222 = vsel %vm193, %v1218, 0.0
    %1223 = vadd.xlane.f32.xlu0 %v1222
    %v1224 = vpop.xlane.xlu0 %1223
    %v1225 = vrcp.pop %v1221
    %v1226 = vrcp.pop %v1224
    %v1227 = vmul.f32 %v1216, %v1225
    %v1228 = vmul.f32 %v1218, %v1226
    %v1229 = vpack.c.bf16 %v1228, %v1227
    %1230 = vrot.lane.b32.xlu0 %v1035, 56
    %v1231 = vpop.permute.xlu0 %1230
    %v1234 = vsel %vm193, %v1229, 0
    %1236 = vmatprep.subr.bf16.mxu0 0
    %1237 = vmatpush1.bf16.msra.mxu0 0
    %1238 = vmatprep.subr.bf16.mxu0 0
    %1239 = vmatpush1.bf16.msra.mxu0 0
    %1240 = vmatprep.subr.bf16.mxu0 0
    %1241 = vmatpush1.bf16.msra.mxu0 0
    %1242 = vmatprep.subr.bf16.mxu0 0
    %1243 = vmatpush1.bf16.msra.mxu0 0
    %1244 = vmatprep.subr.bf16.mxu0 0
    %1245 = vmatpush1.bf16.msra.mxu0 0
    %1246 = vmatprep.subr.bf16.mxu0 0
    %1247 = vmatpush1.bf16.msra.mxu0 0
    %1248 = vmatprep.subr.bf16.mxu0 0
    %1249 = vmatpush1.bf16.msra.mxu0 0
    %1250 = vmatprep.subr.bf16.mxu0 0
    %1251 = vmatpush1.bf16.msra.mxu0 %v1231
    %1252 = vmatprep.subr.bf16.mxu0 0
    %1253 = vmatpush2.bf16.msra.mxu0 0
    %1254 = vmatprep.subr.bf16.mxu0 0
    %1255 = vmatpush2.bf16.msra.mxu0 0
    %1256 = vmatprep.subr.bf16.mxu0 0
    %1257 = vmatpush2.bf16.msra.mxu0 0
    %1258 = vmatprep.subr.bf16.mxu0 0
    %1259 = vmatpush2.bf16.msra.mxu0 0
    %1260 = vmatprep.subr.bf16.mxu0 0
    %1261 = vmatpush2.bf16.msra.mxu0 0
    %1262 = vmatprep.subr.bf16.mxu0 0
    %1263 = vmatpush2.bf16.msra.mxu0 0
    %1264 = vmatprep.subr.bf16.mxu0 0
    %1265 = vmatpush2.bf16.msra.mxu0 0
    %1266 = vmatprep.subr.bf16.mxu0 0
    %1267 = vmatpush2.bf16.msra.mxu0 0
    %1268 = vmatprep.mubr.bf16.mxu0 0
    %1269 = vmatmul.mubr.bf16.gmra.mxu0 %v1234
    %v1270 = vpop.f32.mrf.mxu0
    %v1271 = vadd.f32 0.0, %v1270
    %v1272 = vpop.f32.mrf.mxu0
    %v1273 = vpop.f32.mrf.mxu0
    %v1274 = vadd.f32 0.0, %v1273
    %v1275 = vpop.f32.mrf.mxu0
    %1276 = vdwg.mxu0
    %1277 = vrot.lane.b32.xlu0 %v1035, 112
    %v1278 = vpop.permute.xlu0 %1277
    %1279 = vrot.lane.b32.xlu0 %v1035, 80
    %v1280 = vpop.permute.xlu0 %1279
    %v1282 = vsel %vm145, %v1278, 0
    %v1285 = vsel %vm145, %v1280, 0
    %1287 = vmatprep.subr.bf16.mxu0 0
    %1288 = vmatpush1.bf16.xpose.msra.mxu0 0
    %1289 = vmatprep.subr.bf16.mxu0 0
    %1290 = vmatpush1.bf16.xpose.msra.mxu0 0
    %1291 = vmatprep.subr.bf16.mxu0 0
    %1292 = vmatpush1.bf16.xpose.msra.mxu0 0
    %1293 = vmatprep.subr.bf16.mxu0 0
    %1294 = vmatpush1.bf16.xpose.msra.mxu0 0
    %1295 = vmatprep.subr.bf16.mxu0 0
    %1296 = vmatpush1.bf16.xpose.msra.mxu0 0
    %1297 = vmatprep.subr.bf16.mxu0 0
    %1298 = vmatpush1.bf16.xpose.msra.mxu0 0
    %1299 = vmatprep.subr.bf16.mxu0 0
    %1300 = vmatpush1.bf16.xpose.msra.mxu0 0
    %1301 = vmatprep.subr.bf16.mxu0 0
    %1302 = vmatpush1.bf16.xpose.msra.mxu0 %v1285
    %1303 = vmatprep.subr.bf16.mxu0 0
    %1304 = vmatpush2.bf16.xpose.msra.mxu0 0
    %1305 = vmatprep.subr.bf16.mxu0 0
    %1306 = vmatpush2.bf16.xpose.msra.mxu0 0
    %1307 = vmatprep.subr.bf16.mxu0 0
    %1308 = vmatpush2.bf16.xpose.msra.mxu0 0
    %1309 = vmatprep.subr.bf16.mxu0 0
    %1310 = vmatpush2.bf16.xpose.msra.mxu0 0
    %1311 = vmatprep.subr.bf16.mxu0 0
    %1312 = vmatpush2.bf16.xpose.msra.mxu0 0
    %1313 = vmatprep.subr.bf16.mxu0 0
    %1314 = vmatpush2.bf16.xpose.msra.mxu0 0
    %1315 = vmatprep.subr.bf16.mxu0 0
    %1316 = vmatpush2.bf16.xpose.msra.mxu0 0
    %1317 = vmatprep.subr.bf16.mxu0 0
    %1318 = vmatpush2.bf16.xpose.msra.mxu0 0
    %1319 = vmatprep.mubr.bf16.mxu0 0
    %1320 = vmatmul.mubr.bf16.gmra.mxu0 %v1282
    %v1321 = vpop.f32.mrf.mxu0
    %v1322 = vadd.f32 %v28, %v1321
    %v1323 = vpop.f32.mrf.mxu0
    %v1324 = vpop.f32.mrf.mxu0
    %v1325 = vadd.f32 %v29, %v1324
    %v1326 = vpop.f32.mrf.mxu0
    %1327 = vdwg.mxu0
    %v1328 = vsel %vm193, %v1322, -inf
    %1329 = vmax.xlane.f32.xlu0 %v1328
    %v1330 = vpop.xlane.xlu0 %1329
    %v1331 = vsel %vm193, %v1325, -inf
    %1332 = vmax.xlane.f32.xlu0 %v1331
    %v1333 = vpop.xlane.xlu0 %1332
    %v1334 = vsub.f32 %v1322, %v1330
    %v1335 = vsub.f32 %v1325, %v1333
    %v1336 = vmul.f32 %v1334, 1.442695
    %v1337 = vpow.pop %v1336
    %v1338 = vmul.f32 %v1335, 1.442695
    %v1339 = vpow.pop %v1338
    %v1340 = vsel %vm193, %v1337, 0.0
    %1341 = vadd.xlane.f32.xlu0 %v1340
    %v1342 = vpop.xlane.xlu0 %1341
    %v1343 = vsel %vm193, %v1339, 0.0
    %1344 = vadd.xlane.f32.xlu0 %v1343
    %v1345 = vpop.xlane.xlu0 %1344
    %v1346 = vrcp.pop %v1342
    %v1347 = vrcp.pop %v1345
    %v1348 = vmul.f32 %v1337, %v1346
    %v1349 = vmul.f32 %v1339, %v1347
    %v1350 = vpack.c.bf16 %v1349, %v1348
    %1351 = vrot.lane.b32.xlu0 %v1035, 48
    %v1352 = vpop.permute.xlu0 %1351
    %v1355 = vsel %vm193, %v1350, 0
    %1357 = vmatprep.subr.bf16.mxu0 0
    %1358 = vmatpush1.bf16.msra.mxu0 0
    %1359 = vmatprep.subr.bf16.mxu0 0
    %1360 = vmatpush1.bf16.msra.mxu0 0
    %1361 = vmatprep.subr.bf16.mxu0 0
    %1362 = vmatpush1.bf16.msra.mxu0 0
    %1363 = vmatprep.subr.bf16.mxu0 0
    %1364 = vmatpush1.bf16.msra.mxu0 0
    %1365 = vmatprep.subr.bf16.mxu0 0
    %1366 = vmatpush1.bf16.msra.mxu0 0
    %1367 = vmatprep.subr.bf16.mxu0 0
    %1368 = vmatpush1.bf16.msra.mxu0 0
    %1369 = vmatprep.subr.bf16.mxu0 0
    %1370 = vmatpush1.bf16.msra.mxu0 0
    %1371 = vmatprep.subr.bf16.mxu0 0
    %1372 = vmatpush1.bf16.msra.mxu0 %v1352
    %1373 = vmatprep.subr.bf16.mxu0 0
    %1374 = vmatpush2.bf16.msra.mxu0 0
    %1375 = vmatprep.subr.bf16.mxu0 0
    %1376 = vmatpush2.bf16.msra.mxu0 0
    %1377 = vmatprep.subr.bf16.mxu0 0
    %1378 = vmatpush2.bf16.msra.mxu0 0
    %1379 = vmatprep.subr.bf16.mxu0 0
    %1380 = vmatpush2.bf16.msra.mxu0 0
    %1381 = vmatprep.subr.bf16.mxu0 0
    %1382 = vmatpush2.bf16.msra.mxu0 0
    %1383 = vmatprep.subr.bf16.mxu0 0
    %1384 = vmatpush2.bf16.msra.mxu0 0
    %1385 = vmatprep.subr.bf16.mxu0 0
    %1386 = vmatpush2.bf16.msra.mxu0 0
    %1387 = vmatprep.subr.bf16.mxu0 0
    %1388 = vmatpush2.bf16.msra.mxu0 0
    %1389 = vmatprep.mubr.bf16.mxu0 0
    %1390 = vmatmul.mubr.bf16.gmra.mxu0 %v1355
    %v1391 = vpop.f32.mrf.mxu0
    %v1392 = vadd.f32 0.0, %v1391
    %v1393 = vpop.f32.mrf.mxu0
    %v1394 = vpop.f32.mrf.mxu0
    %v1395 = vadd.f32 0.0, %v1394
    %v1396 = vpop.f32.mrf.mxu0
    %1397 = vdwg.mxu0
    %1398 = vrot.lane.b32.xlu0 %v1035, 104
    %v1399 = vpop.permute.xlu0 %1398
    %1400 = vrot.lane.b32.xlu0 %v1035, 72
    %v1401 = vpop.permute.xlu0 %1400
    %v1403 = vsel %vm145, %v1399, 0
    %v1406 = vsel %vm145, %v1401, 0
    %1408 = vmatprep.subr.bf16.mxu0 0
    %1409 = vmatpush1.bf16.xpose.msra.mxu0 0
    %1410 = vmatprep.subr.bf16.mxu0 0
    %1411 = vmatpush1.bf16.xpose.msra.mxu0 0
    %1412 = vmatprep.subr.bf16.mxu0 0
    %1413 = vmatpush1.bf16.xpose.msra.mxu0 0
    %1414 = vmatprep.subr.bf16.mxu0 0
    %1415 = vmatpush1.bf16.xpose.msra.mxu0 0
    %1416 = vmatprep.subr.bf16.mxu0 0
    %1417 = vmatpush1.bf16.xpose.msra.mxu0 0
    %1418 = vmatprep.subr.bf16.mxu0 0
    %1419 = vmatpush1.bf16.xpose.msra.mxu0 0
    %1420 = vmatprep.subr.bf16.mxu0 0
    %1421 = vmatpush1.bf16.xpose.msra.mxu0 0
    %1422 = vmatprep.subr.bf16.mxu0 0
    %1423 = vmatpush1.bf16.xpose.msra.mxu0 %v1406
    %1424 = vmatprep.subr.bf16.mxu0 0
    %1425 = vmatpush2.bf16.xpose.msra.mxu0 0
    %1426 = vmatprep.subr.bf16.mxu0 0
    %1427 = vmatpush2.bf16.xpose.msra.mxu0 0
    %1428 = vmatprep.subr.bf16.mxu0 0
    %1429 = vmatpush2.bf16.xpose.msra.mxu0 0
    %1430 = vmatprep.subr.bf16.mxu0 0
    %1431 = vmatpush2.bf16.xpose.msra.mxu0 0
    %1432 = vmatprep.subr.bf16.mxu0 0
    %1433 = vmatpush2.bf16.xpose.msra.mxu0 0
    %1434 = vmatprep.subr.bf16.mxu0 0
    %1435 = vmatpush2.bf16.xpose.msra.mxu0 0
    %1436 = vmatprep.subr.bf16.mxu0 0
    %1437 = vmatpush2.bf16.xpose.msra.mxu0 0
    %1438 = vmatprep.subr.bf16.mxu0 0
    %1439 = vmatpush2.bf16.xpose.msra.mxu0 0
    %1440 = vmatprep.mubr.bf16.mxu0 0
    %1441 = vmatmul.mubr.bf16.gmra.mxu0 %v1403
    %v1442 = vpop.f32.mrf.mxu0
    %v1443 = vadd.f32 %v28, %v1442
    %v1444 = vpop.f32.mrf.mxu0
    %v1445 = vpop.f32.mrf.mxu0
    %v1446 = vadd.f32 %v29, %v1445
    %v1447 = vpop.f32.mrf.mxu0
    %1448 = vdwg.mxu0
    %v1449 = vsel %vm193, %v1443, -inf
    %1450 = vmax.xlane.f32.xlu0 %v1449
    %v1451 = vpop.xlane.xlu0 %1450
    %v1452 = vsel %vm193, %v1446, -inf
    %1453 = vmax.xlane.f32.xlu0 %v1452
    %v1454 = vpop.xlane.xlu0 %1453
    %v1455 = vsub.f32 %v1443, %v1451
    %v1456 = vsub.f32 %v1446, %v1454
    %v1457 = vmul.f32 %v1455, 1.442695
    %v1458 = vpow.pop %v1457
    %v1459 = vmul.f32 %v1456, 1.442695
    %v1460 = vpow.pop %v1459
    %v1461 = vsel %vm193, %v1458, 0.0
    %1462 = vadd.xlane.f32.xlu0 %v1461
    %v1463 = vpop.xlane.xlu0 %1462
    %v1464 = vsel %vm193, %v1460, 0.0
    %1465 = vadd.xlane.f32.xlu0 %v1464
    %v1466 = vpop.xlane.xlu0 %1465
    %v1467 = vrcp.pop %v1463
    %v1468 = vrcp.pop %v1466
    %v1469 = vmul.f32 %v1458, %v1467
    %v1470 = vmul.f32 %v1460, %v1468
    %v1471 = vpack.c.bf16 %v1470, %v1469
    %1472 = vrot.lane.b32.xlu0 %v1035, 40
    %v1473 = vpop.permute.xlu0 %1472
    %v1476 = vsel %vm193, %v1471, 0
    %1478 = vmatprep.subr.bf16.mxu0 0
    %1479 = vmatpush1.bf16.msra.mxu0 0
    %1480 = vmatprep.subr.bf16.mxu0 0
    %1481 = vmatpush1.bf16.msra.mxu0 0
    %1482 = vmatprep.subr.bf16.mxu0 0
    %1483 = vmatpush1.bf16.msra.mxu0 0
    %1484 = vmatprep.subr.bf16.mxu0 0
    %1485 = vmatpush1.bf16.msra.mxu0 0
    %1486 = vmatprep.subr.bf16.mxu0 0
    %1487 = vmatpush1.bf16.msra.mxu0 0
    %1488 = vmatprep.subr.bf16.mxu0 0
    %1489 = vmatpush1.bf16.msra.mxu0 0
    %1490 = vmatprep.subr.bf16.mxu0 0
    %1491 = vmatpush1.bf16.msra.mxu0 0
    %1492 = vmatprep.subr.bf16.mxu0 0
    %1493 = vmatpush1.bf16.msra.mxu0 %v1473
    %1494 = vmatprep.subr.bf16.mxu0 0
    %1495 = vmatpush2.bf16.msra.mxu0 0
    %1496 = vmatprep.subr.bf16.mxu0 0
    %1497 = vmatpush2.bf16.msra.mxu0 0
    %1498 = vmatprep.subr.bf16.mxu0 0
    %1499 = vmatpush2.bf16.msra.mxu0 0
    %1500 = vmatprep.subr.bf16.mxu0 0
    %1501 = vmatpush2.bf16.msra.mxu0 0
    %1502 = vmatprep.subr.bf16.mxu0 0
    %1503 = vmatpush2.bf16.msra.mxu0 0
    %1504 = vmatprep.subr.bf16.mxu0 0
    %1505 = vmatpush2.bf16.msra.mxu0 0
    %1506 = vmatprep.subr.bf16.mxu0 0
    %1507 = vmatpush2.bf16.msra.mxu0 0
    %1508 = vmatprep.subr.bf16.mxu0 0
    %1509 = vmatpush2.bf16.msra.mxu0 0
    %1510 = vmatprep.mubr.bf16.mxu0 0
    %1511 = vmatmul.mubr.bf16.gmra.mxu0 %v1476
    %v1512 = vpop.f32.mrf.mxu0
    %v1513 = vadd.f32 0.0, %v1512
    %v1514 = vpop.f32.mrf.mxu0
    %v1515 = vpop.f32.mrf.mxu0
    %v1516 = vadd.f32 0.0, %v1515
    %v1517 = vpop.f32.mrf.mxu0
    %1518 = vdwg.mxu0
    %1521 = vrot.lane.b32.xlu0 %v1271, 8
    %v1522 = vpop.permute.xlu0 %1521
    %1523 = vrot.lane.b32.xlu0 %v1274, 8
    %v1524 = vpop.permute.xlu0 %1523
    %1529 = vrot.lane.b32.xlu0 %v1392, 16
    %v1530 = vpop.permute.xlu0 %1529
    %1531 = vrot.lane.b32.xlu0 %v1395, 16
    %v1532 = vpop.permute.xlu0 %1531
    %1537 = vrot.lane.b32.xlu0 %v1513, 24
    %v1538 = vpop.permute.xlu0 %1537
    %1539 = vrot.lane.b32.xlu0 %v1516, 24
    %v1540 = vpop.permute.xlu0 %1539
    %v1543 = vsel %vm145, %v1150, %v1522
    %v1544 = vsel %vm145, %v1153, %v1524
    %v1545 = vsel %vm193, %v1543, %v1530
    %v1546 = vsel %vm193, %v1544, %v1532
    %v1547 = vsel %vm655, %v1545, %v1538
    %v1548 = vsel %vm655, %v1546, %v1540
    %v1549 = vpack.c.bf16 %v1548, %v1547
    %s1550 = scalar_lea.vmem %s3, 16
    %v1551 = vld [vmem:[%s1550] sm:$0xf]
    %v1552 = vld [vmem:[%s1550 + $0x4] sm:$0xf]
    %v1553 = vld [vmem:[%s1550 + $0x8] sm:$0xf]
    %v1554 = vld [vmem:[%s1550 + $0xc] sm:$0xf]
    %v1559 = vunpack.c.l.b16 %v1551
    %v1560 = vunpack.c.l.b16 %v1552
    %v1561 = vunpack.c.l.b16 %v1553
    %v1562 = vunpack.c.l.b16 %v1554
    %v1563 = vpack.c.b16 %v1560, %v1559
    %v1564 = vpack.c.b16 %v1562, %v1561
    %1568 = vrot.lane.b32.xlu0 %v978, 32
    %v1569 = vpop.permute.xlu0 %1568
    %v1572 = vsel %vm33, %v1549, 0
    %1574 = vmatprep.subr.bf16.mxu0 0
    %1575 = vmatpush1.bf16.msra.mxu0 0
    %1576 = vmatprep.subr.bf16.mxu0 0
    %1577 = vmatpush1.bf16.msra.mxu0 0
    %1578 = vmatprep.subr.bf16.mxu0 0
    %1579 = vmatpush1.bf16.msra.mxu0 0
    %1580 = vmatprep.subr.bf16.mxu0 0
    %1581 = vmatpush1.bf16.msra.mxu0 0
    %1582 = vmatprep.subr.bf16.mxu0 0
    %1583 = vmatpush1.bf16.msra.mxu0 0
    %1584 = vmatprep.subr.bf16.mxu0 0
    %1585 = vmatpush1.bf16.msra.mxu0 0
    %1586 = vmatprep.subr.bf16.mxu0 0
    %1587 = vmatpush1.bf16.msra.mxu0 %v1564
    %1588 = vmatprep.subr.bf16.mxu0 0
    %1589 = vmatpush1.bf16.msra.mxu0 %v1563
    %1590 = vmatprep.subr.bf16.mxu0 0
    %1591 = vmatpush2.bf16.msra.mxu0 0
    %1592 = vmatprep.subr.bf16.mxu0 0
    %1593 = vmatpush2.bf16.msra.mxu0 0
    %1594 = vmatprep.subr.bf16.mxu0 0
    %1595 = vmatpush2.bf16.msra.mxu0 0
    %1596 = vmatprep.subr.bf16.mxu0 0
    %1597 = vmatpush2.bf16.msra.mxu0 0
    %1598 = vmatprep.subr.bf16.mxu0 0
    %1599 = vmatpush2.bf16.msra.mxu0 0
    %1600 = vmatprep.subr.bf16.mxu0 0
    %1601 = vmatpush2.bf16.msra.mxu0 0
    %1602 = vmatprep.subr.bf16.mxu0 0
    %1603 = vmatpush2.bf16.msra.mxu0 0
    %1604 = vmatprep.subr.bf16.mxu0 0
    %1605 = vmatpush2.bf16.msra.mxu0 0
    %1606 = vmatprep.mubr.bf16.mxu0 0
    %1607 = vmatmul.mubr.bf16.gmra.mxu0 %v1572
    %v1608 = vpop.f32.mrf.mxu0
    %v1609 = vadd.f32 %v1569, %v1608
    %v1610 = vpop.f32.mrf.mxu0
    %v1611 = vpop.f32.mrf.mxu0
    %v1612 = vadd.f32 %v1569, %v1611
    %v1613 = vpop.f32.mrf.mxu0
    %1614 = vdwg.mxu0
    %v1615 = vadd.f32 %v964, %v1609
    %v1616 = vadd.f32 %v965, %v1612
    %v1617 = vsel %vm33, %v1615, 0.0
    %1618 = vadd.xlane.f32.xlu0 %v1617
    %v1619 = vpop.xlane.xlu0 %1618
    %v1620 = vsel %vm33, %v1616, 0.0
    %1621 = vadd.xlane.f32.xlu0 %v1620
    %v1622 = vpop.xlane.xlu0 %1621
    %v1623 = vmul.f32 %v1619, %v40
    %v1624 = vmul.f32 %v1622, %v40
    %v1625 = vsub.f32 %v1615, %v1623
    %v1626 = vsub.f32 %v1616, %v1624
    %v1627 = vmul.f32 %v1625, %v1625
    %v1628 = vmul.f32 %v1626, %v1626
    %v1629 = vsel %vm33, %v1627, 0.0
    %1630 = vadd.xlane.f32.xlu0 %v1629
    %v1631 = vpop.xlane.xlu0 %1630
    %v1632 = vsel %vm33, %v1628, 0.0
    %1633 = vadd.xlane.f32.xlu0 %v1632
    %v1634 = vpop.xlane.xlu0 %1633
    %v1635 = vmul.f32 %v1631, %v40
    %v1636 = vmul.f32 %v1634, %v40
    %v1637 = vadd.f32 %v1635, 1e-12
    %v1638 = vadd.f32 %v1636, 1e-12
    %v1639 = vrsqrt.pop %v1637
    %v1640 = vrsqrt.pop %v1638
    %v1641 = vmul.f32 %v1625, %v1639
    %v1642 = vmul.f32 %v1626, %v1640
    %v1643 = vlaneseq
    %v1644 = vshrl.u32 %v1643, 7
    %v1645 = vsub.s32 0, %v1644
    %v1646 = vrot.slane %v967, %v1645
    %1648 = vrot.lane.b32.xlu0 %v1646, 32
    %v1649 = vpop.permute.xlu0 %1648
    %v1651 = vmul.f32 %v1641, %v1649
    %v1652 = vmul.f32 %v1642, %v1649
    %v1653 = vlaneseq
    %v1654 = vshrl.u32 %v1653, 7
    %v1655 = vsub.s32 0, %v1654
    %v1656 = vrot.slane %v968, %v1655
    %v1657 = vadd.f32 %v1651, %v1656
    %v1658 = vadd.f32 %v1652, %v1656
    %v1659 = vpack.c.bf16 %v1658, %v1657
    %s1660 = scalar_lea.vmem %s4, 16
    %v1661 = vld [vmem:[%s1660] sm:$0xf]
    %v1662 = vld [vmem:[%s1660 + $0x4] sm:$0xf]
    %v1663 = vld [vmem:[%s1660 + $0x8] sm:$0xf]
    %v1664 = vld [vmem:[%s1660 + $0xc] sm:$0xf]
    %v1669 = vunpack.c.l.b16 %v1661
    %v1670 = vunpack.c.l.b16 %v1662
    %v1671 = vunpack.c.l.b16 %v1663
    %v1672 = vunpack.c.l.b16 %v1664
    %v1673 = vpack.c.b16 %v1670, %v1669
    %v1674 = vpack.c.b16 %v1672, %v1671
    %v1678 = vsel %vm33, %v1659, 0
    %1680 = vmatprep.subr.bf16.mxu0 0
    %1681 = vmatpush1.bf16.msra.mxu0 0
    %1682 = vmatprep.subr.bf16.mxu0 0
    %1683 = vmatpush1.bf16.msra.mxu0 0
    %1684 = vmatprep.subr.bf16.mxu0 0
    %1685 = vmatpush1.bf16.msra.mxu0 0
    %1686 = vmatprep.subr.bf16.mxu0 0
    %1687 = vmatpush1.bf16.msra.mxu0 0
    %1688 = vmatprep.subr.bf16.mxu0 0
    %1689 = vmatpush1.bf16.msra.mxu0 0
    %1690 = vmatprep.subr.bf16.mxu0 0
    %1691 = vmatpush1.bf16.msra.mxu0 0
    %1692 = vmatprep.subr.bf16.mxu0 0
    %1693 = vmatpush1.bf16.msra.mxu0 %v1674
    %1694 = vmatprep.subr.bf16.mxu0 0
    %1695 = vmatpush1.bf16.msra.mxu0 %v1673
    %1696 = vmatprep.subr.bf16.mxu0 0
    %1697 = vmatpush2.bf16.msra.mxu0 0
    %1698 = vmatprep.subr.bf16.mxu0 0
    %1699 = vmatpush2.bf16.msra.mxu0 0
    %1700 = vmatprep.subr.bf16.mxu0 0
    %1701 = vmatpush2.bf16.msra.mxu0 0
    %1702 = vmatprep.subr.bf16.mxu0 0
    %1703 = vmatpush2.bf16.msra.mxu0 0
    %1704 = vmatprep.subr.bf16.mxu0 0
    %1705 = vmatpush2.bf16.msra.mxu0 0
    %1706 = vmatprep.subr.bf16.mxu0 0
    %1707 = vmatpush2.bf16.msra.mxu0 0
    %1708 = vmatprep.subr.bf16.mxu0 0
    %1709 = vmatpush2.bf16.msra.mxu0 0
    %1710 = vmatprep.subr.bf16.mxu0 0
    %1711 = vmatpush2.bf16.msra.mxu0 0
    %1712 = vmatprep.mubr.bf16.mxu0 0
    %1713 = vmatmul.mubr.bf16.gmra.mxu0 %v1678
    %v1714 = vpop.f32.mrf.mxu0
    %v1715 = vadd.f32 %v1646, %v1714
    %v1716 = vpop.f32.mrf.mxu0
    %v1717 = vpop.f32.mrf.mxu0
    %v1718 = vadd.f32 %v1646, %v1717
    %v1719 = vpop.f32.mrf.mxu0
    %1720 = vdwg.mxu0
    %v1721 = vmul.f32 %v1715, 0.5
    %v1722 = vmul.f32 %v1718, 0.5
    %v1723 = vmul.f32 %v1715, 0.044715
    %v1724 = vmul.f32 %v1718, 0.044715
    %v1725 = vmul.f32 %v1723, %v1715
    %v1726 = vmul.f32 %v1724, %v1718
    %v1727 = vmul.f32 %v1725, %v1715
    %v1728 = vmul.f32 %v1726, %v1718
    %v1729 = vadd.f32 %v1715, %v1727
    %v1730 = vadd.f32 %v1718, %v1728
    %v1731 = vmul.f32 %v1729, 0.7978846
    %v1732 = vmul.f32 %v1730, 0.7978846
    %v1733 = vtanh.pop %v1731
    %v1734 = vtanh.pop %v1732
    %v1735 = vadd.f32 %v1733, 1.0
    %v1736 = vadd.f32 %v1734, 1.0
    %v1737 = vmul.f32 %v1721, %v1735
    %v1738 = vmul.f32 %v1722, %v1736
    %v1739 = vpack.c.bf16 %v1738, %v1737
    %s1740 = scalar_lea.vmem %s5, 32
    %v1741 = vld [vmem:[%s1740] sm:$0xf]
    %v1742 = vld [vmem:[%s1740 + $0x4] sm:$0xf]
    %v1743 = vld [vmem:[%s1740 + $0x8] sm:$0xf]
    %v1744 = vld [vmem:[%s1740 + $0xc] sm:$0xf]
    %v1745 = vld [vmem:[%s1740 + $0x10] sm:$0xf]
    %v1746 = vld [vmem:[%s1740 + $0x14] sm:$0xf]
    %v1747 = vld [vmem:[%s1740 + $0x18] sm:$0xf]
    %v1748 = vld [vmem:[%s1740 + $0x1c] sm:$0xf]
    %v1757 = vunpack.c.l.b16 %v1741
    %v1758 = vunpack.c.l.b16 %v1742
    %v1759 = vunpack.c.l.b16 %v1743
    %v1760 = vunpack.c.l.b16 %v1744
    %v1761 = vunpack.c.l.b16 %v1745
    %v1762 = vunpack.c.l.b16 %v1746
    %v1763 = vunpack.c.l.b16 %v1747
    %v1764 = vunpack.c.l.b16 %v1748
    %v1765 = vpack.c.b16 %v1758, %v1757
    %v1766 = vpack.c.b16 %v1760, %v1759
    %v1767 = vpack.c.b16 %v1762, %v1761
    %v1768 = vpack.c.b16 %v1764, %v1763
    %1773 = vrot.lane.b32.xlu0 %v1646, 64
    %v1774 = vpop.permute.xlu0 %1773
    %v1777 = vsel %vm882, %v1739, 0
    %1779 = vmatprep.subr.bf16.mxu0 0
    %1780 = vmatpush1.bf16.msra.mxu0 0
    %1781 = vmatprep.subr.bf16.mxu0 0
    %1782 = vmatpush1.bf16.msra.mxu0 0
    %1783 = vmatprep.subr.bf16.mxu0 0
    %1784 = vmatpush1.bf16.msra.mxu0 0
    %1785 = vmatprep.subr.bf16.mxu0 0
    %1786 = vmatpush1.bf16.msra.mxu0 0
    %1787 = vmatprep.subr.bf16.mxu0 0
    %1788 = vmatpush1.bf16.msra.mxu0 %v1768
    %1789 = vmatprep.subr.bf16.mxu0 0
    %1790 = vmatpush1.bf16.msra.mxu0 %v1767
    %1791 = vmatprep.subr.bf16.mxu0 0
    %1792 = vmatpush1.bf16.msra.mxu0 %v1766
    %1793 = vmatprep.subr.bf16.mxu0 0
    %1794 = vmatpush1.bf16.msra.mxu0 %v1765
    %1795 = vmatprep.subr.bf16.mxu0 0
    %1796 = vmatpush2.bf16.msra.mxu0 0
    %1797 = vmatprep.subr.bf16.mxu0 0
    %1798 = vmatpush2.bf16.msra.mxu0 0
    %1799 = vmatprep.subr.bf16.mxu0 0
    %1800 = vmatpush2.bf16.msra.mxu0 0
    %1801 = vmatprep.subr.bf16.mxu0 0
    %1802 = vmatpush2.bf16.msra.mxu0 0
    %1803 = vmatprep.subr.bf16.mxu0 0
    %1804 = vmatpush2.bf16.msra.mxu0 0
    %1805 = vmatprep.subr.bf16.mxu0 0
    %1806 = vmatpush2.bf16.msra.mxu0 0
    %1807 = vmatprep.subr.bf16.mxu0 0
    %1808 = vmatpush2.bf16.msra.mxu0 0
    %1809 = vmatprep.subr.bf16.mxu0 0
    %1810 = vmatpush2.bf16.msra.mxu0 0
    %1811 = vmatprep.mubr.bf16.mxu0 0
    %1812 = vmatmul.mubr.bf16.gmra.mxu0 %v1777
    %v1813 = vpop.f32.mrf.mxu0
    %v1814 = vadd.f32 %v1774, %v1813
    %v1815 = vpop.f32.mrf.mxu0
    %v1816 = vpop.f32.mrf.mxu0
    %v1817 = vadd.f32 %v1774, %v1816
    %v1818 = vpop.f32.mrf.mxu0
    %1819 = vdwg.mxu0
    %v1820 = vadd.f32 %v1657, %v1814
    %v1821 = vadd.f32 %v1658, %v1817
    %v1822 = vsel %vm33, %v1820, 0.0
    %1823 = vadd.xlane.f32.xlu0 %v1822
    %v1824 = vpop.xlane.xlu0 %1823
    %v1825 = vsel %vm33, %v1821, 0.0
    %1826 = vadd.xlane.f32.xlu0 %v1825
    %v1827 = vpop.xlane.xlu0 %1826
    %v1828 = vmul.f32 %v1824, %v40
    %v1829 = vmul.f32 %v1827, %v40
    %v1830 = vsub.f32 %v1820, %v1828
    %v1831 = vsub.f32 %v1821, %v1829
    %v1832 = vmul.f32 %v1830, %v1830
    %v1833 = vmul.f32 %v1831, %v1831
    %v1834 = vsel %vm33, %v1832, 0.0
    %1835 = vadd.xlane.f32.xlu0 %v1834
    %v1836 = vpop.xlane.xlu0 %1835
    %v1837 = vsel %vm33, %v1833, 0.0
    %1838 = vadd.xlane.f32.xlu0 %v1837
    %v1839 = vpop.xlane.xlu0 %1838
    %v1840 = vmul.f32 %v1836, %v40
    %v1841 = vmul.f32 %v1839, %v40
    %v1842 = vadd.f32 %v1840, 1e-12
    %v1843 = vadd.f32 %v1841, 1e-12
    %v1844 = vrsqrt.pop %v1842
    %v1845 = vrsqrt.pop %v1843
    %v1846 = vmul.f32 %v1830, %v1844
    %v1847 = vmul.f32 %v1831, %v1845
    %1849 = vrot.lane.b32.xlu0 %v1656, 96
    %v1850 = vpop.permute.xlu0 %1849
    %v1852 = vmul.f32 %v1846, %v1850
    %v1853 = vmul.f32 %v1847, %v1850
    %1854 = vrot.lane.b32.xlu0 %v1656, 64
    %v1855 = vpop.permute.xlu0 %1854
    %v1857 = vadd.f32 %v1852, %v1855
    %v1858 = vadd.f32 %v1853, %v1855
    %1859 = vst.msk [vmem:[#allocation2] sm:$0xff] %vm33, %v1857
    %1860 = vst.msk [vmem:[#allocation2 + $0x8] sm:$0xff] %vm33, %v1858
    // Predicated region
    $region30: #{mdetr_text_encoder.1} parent=1 // pred_check
      _
    $region31: #{mdetr_text_encoder.1} parent=1 // pred_check_branch
      %1862 = sbr.rel (0) target = $region33
    $region32: #{mdetr_text_encoder.1} parent=1 // pred_region
      %s1864 = ssub.s32 256, 256
      %1865 = vsyncadd [#allocation3], %s1864
      %s1866 = sshll.u32 [#allocation2], 4
      %s1867 = int_to_ptr.vmem [resolvable:$true] %s1866
      %1872 = dma.vmem_to_hbm [thread:$0]  %s1867, 256, %s7, [#allocation3], 128, 128, 8
    $region33: #{mdetr_text_encoder.1} parent=1 // pred_fallthru
      _
    // Predicated region
    $region34: #{mdetr_text_encoder.1} parent=1 // pred_check
      _
    $region35: #{mdetr_text_encoder.1} parent=1 // pred_check_branch
      %1874 = sbr.rel (0) target = $region37
    $region36: #{mdetr_text_encoder.1} parent=1 // pred_region
      %1875 = dma.done [#allocation3], 256
    $region37: #{mdetr_text_encoder.1} parent=1 // pred_fallthru
      _
    %1876 = vsyncpa [#allocation3], 1

</llo_original>
